<compile_context>
chip_gen: v5e
topology: v5e:2x2
jax: 0.10.0
libtpu: 0.0.40
codegen_flags: <defaults>
</compile_context>

<pallas_src>
import functools

import jax
import jax.numpy as jnp
from jax.experimental import pallas as pl
from jax.experimental.pallas import tpu as pltpu

LN_EPS = 1e-5


def _layernorm(x, gamma, beta):
    mu = jnp.mean(x, axis=-1, keepdims=True)
    var = jnp.mean(jnp.square(x - mu), axis=-1, keepdims=True)
    return (x - mu) * jax.lax.rsqrt(var + LN_EPS) * gamma + beta


# ---------------------------------------------------------------------------
# Fused GAT (all heads) + stacked-z LayerNorm + semantic attention kernel.
# grid = (dst-node tiles, metapaths); metapath innermost ("arbitrary").
# ---------------------------------------------------------------------------
def han_fused_kernel(adj_ref, feat_ref, el_ref, er_ref, gbias_ref,
                     gamma_ref, beta_ref, w1_ref, b1_ref, q_ref,
                     out_ref, zslab_ref, *, num_heads, out_feats, num_metapaths):
    del out_feats  # (implicit in feat_ref's last dim)
    mp = pl.program_id(1)

    # Additive softmax mask, hoisted out of the head loop (one (Tn, N) pass).
    amask = jnp.where(adj_ref[...] > 0, jnp.float32(0.0), jnp.float32(-1e30))

    head_outs = []
    for hd in range(num_heads):
        # e[v, u] = leaky_relu(el[u] + er[v], 0.2); softmax over incoming edges u.
        e = er_ref[hd] + el_ref[hd]                      # (Tn,1)+(1,N) -> (Tn,N)
        e = jnp.maximum(e, 0.2 * e)                      # leaky_relu, no cmp+select
        e = e + amask                                    # mask non-edges
        e = e - jnp.max(e, axis=1, keepdims=True)
        p = jnp.exp(e)                                   # EUP; masked -> 0
        alpha = p * pl.reciprocal(jnp.sum(p, axis=1, keepdims=True), approx=True)
        head_outs.append(
            jnp.dot(alpha.astype(jnp.bfloat16), feat_ref[hd],
                    preferred_element_type=jnp.float32))             # (Tn, F)

    z = jnp.concatenate(head_outs, axis=-1)              # (Tn, H*F)
    z = z + gbias_ref[...]                               # GAT bias (all heads at once)
    z = jnp.where(z > 0, z, jnp.exp(jnp.minimum(z, 0.0)) - 1.0)      # ELU
    # Stacked-embedding LayerNorm is row-wise -> apply per metapath, keep in the slab.
    zslab_ref[mp] = _layernorm(z, gamma_ref[...], beta_ref[...])

    # Epilogue: semantic attention over metapaths, fused (no HBM round trip of z).
    @pl.when(mp == num_metapaths - 1)
    def _():
        w1 = w1_ref[...]                                 # (HF, HF) bf16
        b1 = b1_ref[...]
        q = q_ref[...]
        scores = []
        for i in range(num_metapaths):
            t = jnp.tanh(jnp.dot(zslab_ref[i].astype(jnp.bfloat16), w1,
                                 preferred_element_type=jnp.float32) + b1)
            scores.append(jnp.sum(t * q, axis=-1, keepdims=True))    # (Tn, 1)
        smax = scores[0]
        for s in scores[1:]:
            smax = jnp.maximum(smax, s)
        ps = [jnp.exp(s - smax) for s in scores]
        den = ps[0]
        for p_ in ps[1:]:
            den = den + p_
        inv = 1.0 / den                                  # exact: weights sum to 1
        acc = (ps[0] * inv) * zslab_ref[0]
        for i in range(1, num_metapaths):
            acc = acc + (ps[i] * inv) * zslab_ref[i]
        out_ref[...] = acc.astype(out_ref.dtype)


def build_combined_gat_params(gat_params, num_heads, out_feats):
    """Fold per-head attn_l/attn_r into the fc weight -> one projection per metapath:
    [W | W@A_l | W@A_r]."""
    hf = num_heads * out_feats
    w_comb, bias_all = [], []
    for gp in gat_params:
        w = gp["w"].astype(jnp.float32)                  # (Din, H*F)
        a_l = jnp.zeros((hf, num_heads), dtype=jnp.float32)
        a_r = jnp.zeros((hf, num_heads), dtype=jnp.float32)
        for hd in range(num_heads):
            sl = slice(hd * out_feats, (hd + 1) * out_feats)
            a_l = a_l.at[sl, hd].set(gp["attn_l"][hd])
            a_r = a_r.at[sl, hd].set(gp["attn_r"][hd])
        w_comb.append(jnp.concatenate([w, w @ a_l, w @ a_r], axis=1))
        bias_all.append(gp["bias"].reshape(1, hf))
    return (jnp.stack(w_comb, axis=0).astype(jnp.bfloat16),   # (M, Din, HF+2H)
            jnp.stack(bias_all, axis=0).astype(jnp.float32))  # (M, 1, HF)


def _choose_tile(n, num_mp, num_heads, out_feats, budget_bytes=40 * 1024 * 1024):
    """Largest dst-node tile (multiple of 8, divides N) whose per-step working set
    (double-buffered inputs + elementwise temps + z slab) fits the VMEM budget."""
    hf = num_heads * out_feats
    if n % 8 != 0:
        return n
    cands = [t for t in range(8, n + 1, 8) if n % t == 0]
    best = cands[0]
    for t in cands:
        est = (2 * t * n * 2                     # adj (bf16), double-buffered
               + 2 * n * hf * 2                  # feat (bf16), double-buffered
               + 2 * num_heads * (n + t) * 4     # el / er (f32)
               + num_mp * t * hf * 4             # z slab scratch
               + 2 * t * hf * 4                  # output tile
               + 4 * t * n * 4                   # live (Tn, N) elementwise temps
               + hf * hf * 2 + 8 * hf * 4)       # semantic-attn weights
        if est <= budget_bytes:
            best = t
    return best


# ---------------------------------------------------------------------------
# HANLayer forward
# ---------------------------------------------------------------------------
def han_layer_forward(adjs, h, params, *, num_heads, out_feats, tn=None):
    num_mp, n, n2 = adjs.shape
    assert n == n2
    din = h.shape[-1]
    hf = num_heads * out_feats
    assert din == hf, "shared LayerNorm requires in_size == num_heads * out_feats"

    gamma = params["ln_gamma"].reshape(1, din).astype(jnp.float32)
    beta = params["ln_beta"].reshape(1, din).astype(jnp.float32)

    # ---- hoisted preprocessing (trivially cheap vs the O(M*N^2) kernel work) ----
    # Sequential LayerNorm chain: metapath i consumes LN applied (i+1) times
    # (`h = self.LN(h)` reassigns h inside the PyTorch loop).
    hs, hc = [], h.astype(jnp.float32)
    for _ in range(num_mp):
        hc = _layernorm(hc, gamma, beta)
        hs.append(hc)
    hln_all = jnp.stack(hs, axis=0)                            # (M, N, Din)

    # One hoisted matmul per metapath: [feat | el | er] = hln_m @ [W | W A_l | W A_r].
    w_comb, bias_all = build_combined_gat_params(params["gat"], num_heads, out_feats)
    proj = jnp.einsum("mnd,mde->mne", hln_all.astype(jnp.bfloat16), w_comb,
                      preferred_element_type=jnp.float32)      # (M, N, HF+2H)
    feat = proj[..., :hf]
    el = proj[..., hf:hf + num_heads]
    er = proj[..., hf + num_heads:hf + 2 * num_heads]
    # Head-major layouts so the kernel never lane-slices:
    feat_h = feat.reshape(num_mp, n, num_heads, out_feats).transpose(0, 2, 1, 3)
    feat_h = feat_h.astype(jnp.bfloat16)                       # (M, H, N, F)
    el_h = el.transpose(0, 2, 1)[:, :, None, :].astype(jnp.float32)   # (M, H, 1, N)
    er_h = er.transpose(0, 2, 1)[:, :, :, None].astype(jnp.float32)   # (M, H, N, 1)

    w1 = params["attn_w1"].astype(jnp.bfloat16)                # (HF, HF)
    b1 = params["attn_b1"].reshape(1, hf).astype(jnp.float32)
    q = params["attn_q"].reshape(1, hf).astype(jnp.float32)

    if tn is None:
        tn = _choose_tile(n, num_mp, num_heads, out_feats)
    assert n % tn == 0 and (tn % 8 == 0 or tn == n)
    num_tiles = n // tn

    kern = functools.partial(han_fused_kernel, num_heads=num_heads,
                             out_feats=out_feats, num_metapaths=num_mp)

    flops = (num_mp * (6 * num_heads * n * n + 2 * n * n * hf + 12 * n * hf)
             + 2 * num_mp * n * hf * hf + 8 * num_mp * n * hf)
    transc = num_mp * (num_heads * n * n + 2 * n * hf) + num_mp * n
    bytes_acc = (num_mp * n * n * 2 + num_mp * n * hf * 2
                 + 2 * num_mp * num_heads * n * 4 + n * hf * 4
                 + num_mp * hf * 4 + hf * hf * 2 + 6 * hf * 4)

    return pl.pallas_call(
        kern,
        grid=(num_tiles, num_mp),
        in_specs=[
            pl.BlockSpec((None, tn, n), lambda v, i: (i, v, 0)),                  # adj row tile
            pl.BlockSpec((None, num_heads, n, out_feats), lambda v, i: (i, 0, 0, 0)),  # feat_src
            pl.BlockSpec((None, num_heads, 1, n), lambda v, i: (i, 0, 0, 0)),     # el (src)
            pl.BlockSpec((None, num_heads, tn, 1), lambda v, i: (i, 0, v, 0)),    # er (dst tile)
            pl.BlockSpec((None, 1, hf), lambda v, i: (i, 0, 0)),                  # GAT bias
            pl.BlockSpec((1, hf), lambda v, i: (0, 0)),                           # LN gamma
            pl.BlockSpec((1, hf), lambda v, i: (0, 0)),                           # LN beta
            pl.BlockSpec((hf, hf), lambda v, i: (0, 0)),                          # attn W1
            pl.BlockSpec((1, hf), lambda v, i: (0, 0)),                           # attn b1
            pl.BlockSpec((1, hf), lambda v, i: (0, 0)),                           # attn q
        ],
        out_specs=pl.BlockSpec((tn, hf), lambda v, i: (v, 0)),
        out_shape=jax.ShapeDtypeStruct((n, hf), jnp.float32),
        scratch_shapes=[pltpu.VMEM((num_mp, tn, hf), jnp.float32)],  # per-tile z slab
        compiler_params=pltpu.CompilerParams(
            dimension_semantics=("parallel", "arbitrary"),
            vmem_limit_bytes=48 * 1024 * 1024),
        cost_estimate=pl.CostEstimate(flops=flops, transcendentals=transc,
                                      bytes_accessed=bytes_acc),
    )(adjs.astype(jnp.bfloat16), feat_h, el_h, er_h, bias_all,
      gamma, beta, w1, b1, q)


if __name__ == "__main__":
    # Small shapes consistent with the module: in_size must equal out_size * num_heads
    # because the same LayerNorm(in_size) is reused on the stacked GAT outputs.
    N = 128               # nodes
    NUM_META_PATHS = 3
    NUM_HEADS = 4
    OUT_SIZE = 32
    IN_SIZE = OUT_SIZE * NUM_HEADS    # 128 (lane-dense output)

    key = jax.random.PRNGKey(0)
    keys = jax.random.split(key, 16)

    h = jax.random.normal(keys[0], (N, IN_SIZE), dtype=jnp.float32)

    # Dense adjacency masks per metapath (adj[v, u] = 1 iff edge u -> v), + self loops.
    adjs = []
    for mi in range(NUM_META_PATHS):
        a = (jax.random.uniform(keys[1 + mi], (N, N)) < 0.1).astype(jnp.float32)
        a = a * (1.0 - jnp.eye(N, dtype=jnp.float32))         # drop existing self loops
        a = jnp.maximum(a, jnp.eye(N, dtype=jnp.float32))     # add_self_loop
        adjs.append(a)
    adjs = jnp.stack(adjs, axis=0)                            # (M, N, N)

    params = {
        "ln_gamma": (1.0 + 0.1 * jax.random.normal(keys[5], (1, IN_SIZE))).astype(jnp.float32),
        "ln_beta": (0.1 * jax.random.normal(keys[6], (1, IN_SIZE))).astype(jnp.float32),
        "attn_w1": (0.1 * jax.random.normal(keys[7], (IN_SIZE, IN_SIZE))).astype(jnp.float32),
        "attn_b1": (0.1 * jax.random.normal(keys[8], (1, IN_SIZE))).astype(jnp.float32),
        "attn_q": (0.1 * jax.random.normal(keys[9], (IN_SIZE, 1))).astype(jnp.float32),
        "gat": [],
    }
    for mi in range(NUM_META_PATHS):
        gk = jax.random.split(jax.random.fold_in(keys[10], mi), 4)
        params["gat"].append({
            "w": (0.1 * jax.random.normal(gk[0], (IN_SIZE, NUM_HEADS * OUT_SIZE))).astype(jnp.float32),
            "attn_l": (0.1 * jax.random.normal(gk[1], (NUM_HEADS, OUT_SIZE))).astype(jnp.float32),
            "attn_r": (0.1 * jax.random.normal(gk[2], (NUM_HEADS, OUT_SIZE))).astype(jnp.float32),
            "bias": (0.1 * jax.random.normal(gk[3], (NUM_HEADS, OUT_SIZE))).astype(jnp.float32),
        })

    # tn=64 -> grid = (2 node tiles ["parallel"], 3 metapaths ["arbitrary"]).
    out = han_layer_forward(adjs, h, params, num_heads=NUM_HEADS,
                            out_feats=OUT_SIZE, tn=64)
    out = jax.block_until_ready(out)
    assert out.shape == (N, IN_SIZE), out.shape
    assert bool(jnp.all(jnp.isfinite(out)))
    print("KERNEL_OK")
</pallas_src>

<mosaic_0001>
module attributes {stable_mosaic.version = 11 : i64} {
  func.func @han_fused_kernel(%arg0: i32, %arg1: i32, %arg2: memref<1x64x128xbf16, #tpu.memory_space<vmem>>, %arg3: memref<1x4x128x32xbf16, #tpu.memory_space<vmem>>, %arg4: memref<1x4x1x128xf32, #tpu.memory_space<vmem>>, %arg5: memref<1x4x64x1xf32, #tpu.memory_space<vmem>>, %arg6: memref<1x1x128xf32, #tpu.memory_space<vmem>>, %arg7: memref<1x128xf32, #tpu.memory_space<vmem>>, %arg8: memref<1x128xf32, #tpu.memory_space<vmem>>, %arg9: memref<128x128xbf16, #tpu.memory_space<vmem>>, %arg10: memref<1x128xf32, #tpu.memory_space<vmem>>, %arg11: memref<1x128xf32, #tpu.memory_space<vmem>>, %arg12: memref<64x128xf32, #tpu.memory_space<vmem>>, %arg13: memref<3x64x128xf32, #tpu.memory_space<vmem>>) attributes {dimension_semantics = [#tpu.dimension_semantics<parallel>, #tpu.dimension_semantics<arbitrary>], iteration_bounds = array<i64: 2, 3>, scalar_prefetch = 0 : i64, scratch_operands = 1 : i64, tpu.core_type = #tpu.core_type<tc>, window_params = [{transform_indices = @transform_0, window_bounds = array<i64: 1, 64, 128>}, {transform_indices = @transform_1, window_bounds = array<i64: 1, 4, 128, 32>}, {transform_indices = @transform_2, window_bounds = array<i64: 1, 4, 1, 128>}, {transform_indices = @transform_3, window_bounds = array<i64: 1, 4, 64, 1>}, {transform_indices = @transform_4, window_bounds = array<i64: 1, 1, 128>}, {pipeline_mode = #tpu.pipeline_mode<synchronous>, transform_indices = @transform_5, window_bounds = array<i64: 1, 128>}, {pipeline_mode = #tpu.pipeline_mode<synchronous>, transform_indices = @transform_6, window_bounds = array<i64: 1, 128>}, {pipeline_mode = #tpu.pipeline_mode<synchronous>, transform_indices = @transform_7, window_bounds = array<i64: 128, 128>}, {pipeline_mode = #tpu.pipeline_mode<synchronous>, transform_indices = @transform_8, window_bounds = array<i64: 1, 128>}, {pipeline_mode = #tpu.pipeline_mode<synchronous>, transform_indices = @transform_9, window_bounds = array<i64: 1, 128>}, {transform_indices = @transform_10, window_bounds = array<i64: 64, 128>}]} {
    %c0 = arith.constant 0 : index
    %c0_0 = arith.constant 0 : index
    %c0_1 = arith.constant 0 : index
    %0 = vector.load %arg2[%c0, %c0_0, %c0_1] : memref<1x64x128xbf16, #tpu.memory_space<vmem>>, vector<1x64x128xbf16>
    %1 = vector.shape_cast %0 : vector<1x64x128xbf16> to vector<64x128xbf16>
    %cst = arith.constant 0.000000e+00 : bf16
    %2 = vector.broadcast %cst : bf16 to vector<64x128xbf16>
    %3 = arith.cmpf ogt, %1, %2 : vector<64x128xbf16>
    %cst_2 = arith.constant 0.000000e+00 : f32
    %cst_3 = arith.constant -1.000000e+30 : f32
    %4 = vector.broadcast %cst_2 : f32 to vector<64x128xf32>
    %5 = vector.broadcast %cst_3 : f32 to vector<64x128xf32>
    %6 = arith.select %3, %4, %5 : vector<64x128xi1>, vector<64x128xf32>
    %c0_4 = arith.constant 0 : index
    %c0_5 = arith.constant 0 : index
    %c0_6 = arith.constant 0 : index
    %c0_7 = arith.constant 0 : index
    %7 = vector.load %arg5[%c0_4, %c0_5, %c0_6, %c0_7] : memref<1x4x64x1xf32, #tpu.memory_space<vmem>>, vector<1x1x64x1xf32>
    %8 = vector.shape_cast %7 : vector<1x1x64x1xf32> to vector<64x1xf32>
    %c0_8 = arith.constant 0 : index
    %c0_9 = arith.constant 0 : index
    %c0_10 = arith.constant 0 : index
    %c0_11 = arith.constant 0 : index
    %9 = vector.load %arg4[%c0_8, %c0_9, %c0_10, %c0_11] : memref<1x4x1x128xf32, #tpu.memory_space<vmem>>, vector<1x1x1x128xf32>
    %10 = vector.shape_cast %9 : vector<1x1x1x128xf32> to vector<1x128xf32>
    %11 = vector.broadcast %8 : vector<64x1xf32> to vector<64x128xf32>
    %12 = vector.broadcast %10 : vector<1x128xf32> to vector<64x128xf32>
    %13 = arith.addf %11, %12 : vector<64x128xf32>
    %cst_12 = arith.constant 2.000000e-01 : f32
    %14 = vector.broadcast %cst_12 : f32 to vector<64x128xf32>
    %15 = arith.mulf %14, %13 : vector<64x128xf32>
    %16 = arith.maximumf %13, %15 : vector<64x128xf32>
    %17 = arith.addf %16, %6 : vector<64x128xf32>
    %cst_13 = arith.constant dense<0xFF800000> : vector<64xf32>
    %18 = vector.multi_reduction <maximumf>, %17, %cst_13 [1] : vector<64x128xf32> to vector<64xf32>
    %19 = vector.shape_cast %18 : vector<64xf32> to vector<64x1xf32>
    %20 = vector.broadcast %19 : vector<64x1xf32> to vector<64x128xf32>
    %21 = arith.subf %17, %20 : vector<64x128xf32>
    %22 = math.exp %21 : vector<64x128xf32>
    %cst_14 = arith.constant dense<0.000000e+00> : vector<64xf32>
    %23 = vector.multi_reduction <add>, %22, %cst_14 [1] : vector<64x128xf32> to vector<64xf32>
    %24 = vector.shape_cast %23 : vector<64xf32> to vector<64x1xf32>
    %25 = tpu.reciprocal %24 {approx = true} : vector<64x1xf32> -> vector<64x1xf32>
    %26 = vector.broadcast %25 : vector<64x1xf32> to vector<64x128xf32>
    %27 = arith.mulf %22, %26 : vector<64x128xf32>
    %28 = arith.truncf %27 : vector<64x128xf32> to vector<64x128xbf16>
    %c0_15 = arith.constant 0 : index
    %c0_16 = arith.constant 0 : index
    %c0_17 = arith.constant 0 : index
    %c0_18 = arith.constant 0 : index
    %29 = vector.load %arg3[%c0_15, %c0_16, %c0_17, %c0_18] : memref<1x4x128x32xbf16, #tpu.memory_space<vmem>>, vector<1x1x128x32xbf16>
    %30 = vector.shape_cast %29 : vector<1x1x128x32xbf16> to vector<128x32xbf16>
    %cst_19 = arith.constant dense<0.000000e+00> : vector<64x32xf32>
    %31 = tpu.matmul %28, %30, %cst_19 {dimension_numbers = #tpu.dot_dimension_numbers<[1], [0], [0], [1], [0, 0, 1, 1], [], []>} : vector<64x128xbf16>, vector<128x32xbf16>, vector<64x32xf32> -> vector<64x32xf32>
    %c0_20 = arith.constant 0 : index
    %c1 = arith.constant 1 : index
    %c0_21 = arith.constant 0 : index
    %c0_22 = arith.constant 0 : index
    %32 = vector.load %arg5[%c0_20, %c1, %c0_21, %c0_22] : memref<1x4x64x1xf32, #tpu.memory_space<vmem>>, vector<1x1x64x1xf32>
    %33 = vector.shape_cast %32 : vector<1x1x64x1xf32> to vector<64x1xf32>
    %c0_23 = arith.constant 0 : index
    %c1_24 = arith.constant 1 : index
    %c0_25 = arith.constant 0 : index
    %c0_26 = arith.constant 0 : index
    %34 = vector.load %arg4[%c0_23, %c1_24, %c0_25, %c0_26] : memref<1x4x1x128xf32, #tpu.memory_space<vmem>>, vector<1x1x1x128xf32>
    %35 = vector.shape_cast %34 : vector<1x1x1x128xf32> to vector<1x128xf32>
    %36 = vector.broadcast %33 : vector<64x1xf32> to vector<64x128xf32>
    %37 = vector.broadcast %35 : vector<1x128xf32> to vector<64x128xf32>
    %38 = arith.addf %36, %37 : vector<64x128xf32>
    %cst_27 = arith.constant 2.000000e-01 : f32
    %39 = vector.broadcast %cst_27 : f32 to vector<64x128xf32>
    %40 = arith.mulf %39, %38 : vector<64x128xf32>
    %41 = arith.maximumf %38, %40 : vector<64x128xf32>
    %42 = arith.addf %41, %6 : vector<64x128xf32>
    %cst_28 = arith.constant dense<0xFF800000> : vector<64xf32>
    %43 = vector.multi_reduction <maximumf>, %42, %cst_28 [1] : vector<64x128xf32> to vector<64xf32>
    %44 = vector.shape_cast %43 : vector<64xf32> to vector<64x1xf32>
    %45 = vector.broadcast %44 : vector<64x1xf32> to vector<64x128xf32>
    %46 = arith.subf %42, %45 : vector<64x128xf32>
    %47 = math.exp %46 : vector<64x128xf32>
    %cst_29 = arith.constant dense<0.000000e+00> : vector<64xf32>
    %48 = vector.multi_reduction <add>, %47, %cst_29 [1] : vector<64x128xf32> to vector<64xf32>
    %49 = vector.shape_cast %48 : vector<64xf32> to vector<64x1xf32>
    %50 = tpu.reciprocal %49 {approx = true} : vector<64x1xf32> -> vector<64x1xf32>
    %51 = vector.broadcast %50 : vector<64x1xf32> to vector<64x128xf32>
    %52 = arith.mulf %47, %51 : vector<64x128xf32>
    %53 = arith.truncf %52 : vector<64x128xf32> to vector<64x128xbf16>
    %c0_30 = arith.constant 0 : index
    %c1_31 = arith.constant 1 : index
    %c0_32 = arith.constant 0 : index
    %c0_33 = arith.constant 0 : index
    %54 = vector.load %arg3[%c0_30, %c1_31, %c0_32, %c0_33] : memref<1x4x128x32xbf16, #tpu.memory_space<vmem>>, vector<1x1x128x32xbf16>
    %55 = vector.shape_cast %54 : vector<1x1x128x32xbf16> to vector<128x32xbf16>
    %cst_34 = arith.constant dense<0.000000e+00> : vector<64x32xf32>
    %56 = tpu.matmul %53, %55, %cst_34 {dimension_numbers = #tpu.dot_dimension_numbers<[1], [0], [0], [1], [0, 0, 1, 1], [], []>} : vector<64x128xbf16>, vector<128x32xbf16>, vector<64x32xf32> -> vector<64x32xf32>
    %c0_35 = arith.constant 0 : index
    %c2 = arith.constant 2 : index
    %c0_36 = arith.constant 0 : index
    %c0_37 = arith.constant 0 : index
    %57 = vector.load %arg5[%c0_35, %c2, %c0_36, %c0_37] : memref<1x4x64x1xf32, #tpu.memory_space<vmem>>, vector<1x1x64x1xf32>
    %58 = vector.shape_cast %57 : vector<1x1x64x1xf32> to vector<64x1xf32>
    %c0_38 = arith.constant 0 : index
    %c2_39 = arith.constant 2 : index
    %c0_40 = arith.constant 0 : index
    %c0_41 = arith.constant 0 : index
    %59 = vector.load %arg4[%c0_38, %c2_39, %c0_40, %c0_41] : memref<1x4x1x128xf32, #tpu.memory_space<vmem>>, vector<1x1x1x128xf32>
    %60 = vector.shape_cast %59 : vector<1x1x1x128xf32> to vector<1x128xf32>
    %61 = vector.broadcast %58 : vector<64x1xf32> to vector<64x128xf32>
    %62 = vector.broadcast %60 : vector<1x128xf32> to vector<64x128xf32>
    %63 = arith.addf %61, %62 : vector<64x128xf32>
    %cst_42 = arith.constant 2.000000e-01 : f32
    %64 = vector.broadcast %cst_42 : f32 to vector<64x128xf32>
    %65 = arith.mulf %64, %63 : vector<64x128xf32>
    %66 = arith.maximumf %63, %65 : vector<64x128xf32>
    %67 = arith.addf %66, %6 : vector<64x128xf32>
    %cst_43 = arith.constant dense<0xFF800000> : vector<64xf32>
    %68 = vector.multi_reduction <maximumf>, %67, %cst_43 [1] : vector<64x128xf32> to vector<64xf32>
    %69 = vector.shape_cast %68 : vector<64xf32> to vector<64x1xf32>
    %70 = vector.broadcast %69 : vector<64x1xf32> to vector<64x128xf32>
    %71 = arith.subf %67, %70 : vector<64x128xf32>
    %72 = math.exp %71 : vector<64x128xf32>
    %cst_44 = arith.constant dense<0.000000e+00> : vector<64xf32>
    %73 = vector.multi_reduction <add>, %72, %cst_44 [1] : vector<64x128xf32> to vector<64xf32>
    %74 = vector.shape_cast %73 : vector<64xf32> to vector<64x1xf32>
    %75 = tpu.reciprocal %74 {approx = true} : vector<64x1xf32> -> vector<64x1xf32>
    %76 = vector.broadcast %75 : vector<64x1xf32> to vector<64x128xf32>
    %77 = arith.mulf %72, %76 : vector<64x128xf32>
    %78 = arith.truncf %77 : vector<64x128xf32> to vector<64x128xbf16>
    %c0_45 = arith.constant 0 : index
    %c2_46 = arith.constant 2 : index
    %c0_47 = arith.constant 0 : index
    %c0_48 = arith.constant 0 : index
    %79 = vector.load %arg3[%c0_45, %c2_46, %c0_47, %c0_48] : memref<1x4x128x32xbf16, #tpu.memory_space<vmem>>, vector<1x1x128x32xbf16>
    %80 = vector.shape_cast %79 : vector<1x1x128x32xbf16> to vector<128x32xbf16>
    %cst_49 = arith.constant dense<0.000000e+00> : vector<64x32xf32>
    %81 = tpu.matmul %78, %80, %cst_49 {dimension_numbers = #tpu.dot_dimension_numbers<[1], [0], [0], [1], [0, 0, 1, 1], [], []>} : vector<64x128xbf16>, vector<128x32xbf16>, vector<64x32xf32> -> vector<64x32xf32>
    %c0_50 = arith.constant 0 : index
    %c3 = arith.constant 3 : index
    %c0_51 = arith.constant 0 : index
    %c0_52 = arith.constant 0 : index
    %82 = vector.load %arg5[%c0_50, %c3, %c0_51, %c0_52] : memref<1x4x64x1xf32, #tpu.memory_space<vmem>>, vector<1x1x64x1xf32>
    %83 = vector.shape_cast %82 : vector<1x1x64x1xf32> to vector<64x1xf32>
    %c0_53 = arith.constant 0 : index
    %c3_54 = arith.constant 3 : index
    %c0_55 = arith.constant 0 : index
    %c0_56 = arith.constant 0 : index
    %84 = vector.load %arg4[%c0_53, %c3_54, %c0_55, %c0_56] : memref<1x4x1x128xf32, #tpu.memory_space<vmem>>, vector<1x1x1x128xf32>
    %85 = vector.shape_cast %84 : vector<1x1x1x128xf32> to vector<1x128xf32>
    %86 = vector.broadcast %83 : vector<64x1xf32> to vector<64x128xf32>
    %87 = vector.broadcast %85 : vector<1x128xf32> to vector<64x128xf32>
    %88 = arith.addf %86, %87 : vector<64x128xf32>
    %cst_57 = arith.constant 2.000000e-01 : f32
    %89 = vector.broadcast %cst_57 : f32 to vector<64x128xf32>
    %90 = arith.mulf %89, %88 : vector<64x128xf32>
    %91 = arith.maximumf %88, %90 : vector<64x128xf32>
    %92 = arith.addf %91, %6 : vector<64x128xf32>
    %cst_58 = arith.constant dense<0xFF800000> : vector<64xf32>
    %93 = vector.multi_reduction <maximumf>, %92, %cst_58 [1] : vector<64x128xf32> to vector<64xf32>
    %94 = vector.shape_cast %93 : vector<64xf32> to vector<64x1xf32>
    %95 = vector.broadcast %94 : vector<64x1xf32> to vector<64x128xf32>
    %96 = arith.subf %92, %95 : vector<64x128xf32>
    %97 = math.exp %96 : vector<64x128xf32>
    %cst_59 = arith.constant dense<0.000000e+00> : vector<64xf32>
    %98 = vector.multi_reduction <add>, %97, %cst_59 [1] : vector<64x128xf32> to vector<64xf32>
    %99 = vector.shape_cast %98 : vector<64xf32> to vector<64x1xf32>
    %100 = tpu.reciprocal %99 {approx = true} : vector<64x1xf32> -> vector<64x1xf32>
    %101 = vector.broadcast %100 : vector<64x1xf32> to vector<64x128xf32>
    %102 = arith.mulf %97, %101 : vector<64x128xf32>
    %103 = arith.truncf %102 : vector<64x128xf32> to vector<64x128xbf16>
    %c0_60 = arith.constant 0 : index
    %c3_61 = arith.constant 3 : index
    %c0_62 = arith.constant 0 : index
    %c0_63 = arith.constant 0 : index
    %104 = vector.load %arg3[%c0_60, %c3_61, %c0_62, %c0_63] : memref<1x4x128x32xbf16, #tpu.memory_space<vmem>>, vector<1x1x128x32xbf16>
    %105 = vector.shape_cast %104 : vector<1x1x128x32xbf16> to vector<128x32xbf16>
    %cst_64 = arith.constant dense<0.000000e+00> : vector<64x32xf32>
    %106 = tpu.matmul %103, %105, %cst_64 {dimension_numbers = #tpu.dot_dimension_numbers<[1], [0], [0], [1], [0, 0, 1, 1], [], []>} : vector<64x128xbf16>, vector<128x32xbf16>, vector<64x32xf32> -> vector<64x32xf32>
    %107 = tpu.concatenate %31, %56, %81, %106 in 1 : vector<64x32xf32>, vector<64x32xf32>, vector<64x32xf32>, vector<64x32xf32> -> vector<64x128xf32>
    %c0_65 = arith.constant 0 : index
    %c0_66 = arith.constant 0 : index
    %c0_67 = arith.constant 0 : index
    %108 = vector.load %arg6[%c0_65, %c0_66, %c0_67] : memref<1x1x128xf32, #tpu.memory_space<vmem>>, vector<1x1x128xf32>
    %109 = vector.shape_cast %108 : vector<1x1x128xf32> to vector<1x128xf32>
    %110 = vector.broadcast %109 : vector<1x128xf32> to vector<64x128xf32>
    %111 = arith.addf %107, %110 : vector<64x128xf32>
    %cst_68 = arith.constant 0.000000e+00 : f32
    %112 = vector.broadcast %cst_68 : f32 to vector<64x128xf32>
    %113 = arith.cmpf ogt, %111, %112 : vector<64x128xf32>
    %cst_69 = arith.constant 0.000000e+00 : f32
    %114 = vector.broadcast %cst_69 : f32 to vector<64x128xf32>
    %115 = arith.minimumf %111, %114 : vector<64x128xf32>
    %116 = math.exp %115 : vector<64x128xf32>
    %cst_70 = arith.constant 1.000000e+00 : f32
    %117 = vector.broadcast %cst_70 : f32 to vector<64x128xf32>
    %118 = arith.subf %116, %117 : vector<64x128xf32>
    %119 = arith.select %113, %111, %118 : vector<64x128xi1>, vector<64x128xf32>
    %c0_71 = arith.constant 0 : index
    %c0_72 = arith.constant 0 : index
    %120 = vector.load %arg7[%c0_71, %c0_72] : memref<1x128xf32, #tpu.memory_space<vmem>>, vector<1x128xf32>
    %c0_73 = arith.constant 0 : index
    %c0_74 = arith.constant 0 : index
    %121 = vector.load %arg8[%c0_73, %c0_74] : memref<1x128xf32, #tpu.memory_space<vmem>>, vector<1x128xf32>
    %cst_75 = arith.constant dense<0.000000e+00> : vector<64xf32>
    %122 = vector.multi_reduction <add>, %119, %cst_75 [1] : vector<64x128xf32> to vector<64xf32>
    %123 = vector.shape_cast %122 : vector<64xf32> to vector<64x1xf32>
    %cst_76 = arith.constant 1.280000e+02 : f32
    %124 = vector.broadcast %cst_76 : f32 to vector<64x1xf32>
    %125 = arith.divf %123, %124 : vector<64x1xf32>
    %126 = vector.broadcast %125 : vector<64x1xf32> to vector<64x128xf32>
    %127 = arith.subf %119, %126 : vector<64x128xf32>
    %128 = arith.mulf %127, %127 : vector<64x128xf32>
    %cst_77 = arith.constant dense<0.000000e+00> : vector<64xf32>
    %129 = vector.multi_reduction <add>, %128, %cst_77 [1] : vector<64x128xf32> to vector<64xf32>
    %130 = vector.shape_cast %129 : vector<64xf32> to vector<64x1xf32>
    %cst_78 = arith.constant 1.280000e+02 : f32
    %131 = vector.broadcast %cst_78 : f32 to vector<64x1xf32>
    %132 = arith.divf %130, %131 : vector<64x1xf32>
    %133 = vector.broadcast %125 : vector<64x1xf32> to vector<64x128xf32>
    %134 = arith.subf %119, %133 : vector<64x128xf32>
    %cst_79 = arith.constant 9.99999974E-6 : f32
    %135 = vector.broadcast %cst_79 : f32 to vector<64x1xf32>
    %136 = arith.addf %132, %135 : vector<64x1xf32>
    %137 = math.rsqrt %136 : vector<64x1xf32>
    %138 = vector.broadcast %137 : vector<64x1xf32> to vector<64x128xf32>
    %139 = arith.mulf %134, %138 : vector<64x128xf32>
    %140 = vector.broadcast %120 : vector<1x128xf32> to vector<64x128xf32>
    %141 = arith.mulf %139, %140 : vector<64x128xf32>
    %142 = vector.broadcast %121 : vector<1x128xf32> to vector<64x128xf32>
    %143 = arith.addf %141, %142 : vector<64x128xf32>
    %144 = arith.index_cast %arg1 : i32 to index
    %c0_80 = arith.constant 0 : index
    %c0_81 = arith.constant 0 : index
    %145 = vector.load %arg13[%144, %c0_80, %c0_81] : memref<3x64x128xf32, #tpu.memory_space<vmem>>, vector<1x64x128xf32>
    %146 = vector.shape_cast %145 : vector<1x64x128xf32> to vector<64x128xf32>
    %147 = vector.shape_cast %143 : vector<64x128xf32> to vector<1x64x128xf32>
    tpu.vector_store %arg13[%144, %c0_80, %c0_81], %147 {strides = array<i32>} : memref<3x64x128xf32, #tpu.memory_space<vmem>>, vector<1x64x128xf32>,
    %c2_i32 = arith.constant 2 : i32
    %148 = arith.cmpi eq, %arg1, %c2_i32 : i32
    %149 = arith.extui %148 : i1 to i32
    %c0_i32 = arith.constant 0 : i32
    %150 = arith.cmpi ne, %149, %c0_i32 : i32
    scf.if %150 {
      %c0_82 = arith.constant 0 : index
      %c0_83 = arith.constant 0 : index
      %151 = vector.load %arg9[%c0_82, %c0_83] : memref<128x128xbf16, #tpu.memory_space<vmem>>, vector<128x128xbf16>
      %c0_84 = arith.constant 0 : index
      %c0_85 = arith.constant 0 : index
      %152 = vector.load %arg10[%c0_84, %c0_85] : memref<1x128xf32, #tpu.memory_space<vmem>>, vector<1x128xf32>
      %c0_86 = arith.constant 0 : index
      %c0_87 = arith.constant 0 : index
      %153 = vector.load %arg11[%c0_86, %c0_87] : memref<1x128xf32, #tpu.memory_space<vmem>>, vector<1x128xf32>
      %c0_88 = arith.constant 0 : index
      %c0_89 = arith.constant 0 : index
      %c0_90 = arith.constant 0 : index
      %154 = vector.load %arg13[%c0_88, %c0_89, %c0_90] : memref<3x64x128xf32, #tpu.memory_space<vmem>>, vector<1x64x128xf32>
      %155 = vector.shape_cast %154 : vector<1x64x128xf32> to vector<64x128xf32>
      %156 = arith.truncf %155 : vector<64x128xf32> to vector<64x128xbf16>
      %cst_91 = arith.constant dense<0.000000e+00> : vector<64x128xf32>
      %157 = tpu.matmul %156, %151, %cst_91 {dimension_numbers = #tpu.dot_dimension_numbers<[1], [0], [0], [1], [0, 0, 1, 1], [], []>} : vector<64x128xbf16>, vector<128x128xbf16>, vector<64x128xf32> -> vector<64x128xf32>
      %158 = vector.broadcast %152 : vector<1x128xf32> to vector<64x128xf32>
      %159 = arith.addf %157, %158 : vector<64x128xf32>
      %160 = math.tanh %159 : vector<64x128xf32>
      %161 = vector.broadcast %153 : vector<1x128xf32> to vector<64x128xf32>
      %162 = arith.mulf %160, %161 : vector<64x128xf32>
      %cst_92 = arith.constant dense<0.000000e+00> : vector<64xf32>
      %163 = vector.multi_reduction <add>, %162, %cst_92 [1] : vector<64x128xf32> to vector<64xf32>
      %164 = vector.shape_cast %163 : vector<64xf32> to vector<64x1xf32>
      %c1_93 = arith.constant 1 : index
      %c0_94 = arith.constant 0 : index
      %c0_95 = arith.constant 0 : index
      %165 = vector.load %arg13[%c1_93, %c0_94, %c0_95] : memref<3x64x128xf32, #tpu.memory_space<vmem>>, vector<1x64x128xf32>
      %166 = vector.shape_cast %165 : vector<1x64x128xf32> to vector<64x128xf32>
      %167 = arith.truncf %166 : vector<64x128xf32> to vector<64x128xbf16>
      %cst_96 = arith.constant dense<0.000000e+00> : vector<64x128xf32>
      %168 = tpu.matmul %167, %151, %cst_96 {dimension_numbers = #tpu.dot_dimension_numbers<[1], [0], [0], [1], [0, 0, 1, 1], [], []>} : vector<64x128xbf16>, vector<128x128xbf16>, vector<64x128xf32> -> vector<64x128xf32>
      %169 = vector.broadcast %152 : vector<1x128xf32> to vector<64x128xf32>
      %170 = arith.addf %168, %169 : vector<64x128xf32>
      %171 = math.tanh %170 : vector<64x128xf32>
      %172 = vector.broadcast %153 : vector<1x128xf32> to vector<64x128xf32>
      %173 = arith.mulf %171, %172 : vector<64x128xf32>
      %cst_97 = arith.constant dense<0.000000e+00> : vector<64xf32>
      %174 = vector.multi_reduction <add>, %173, %cst_97 [1] : vector<64x128xf32> to vector<64xf32>
      %175 = vector.shape_cast %174 : vector<64xf32> to vector<64x1xf32>
      %c2_98 = arith.constant 2 : index
      %c0_99 = arith.constant 0 : index
      %c0_100 = arith.constant 0 : index
      %176 = vector.load %arg13[%c2_98, %c0_99, %c0_100] : memref<3x64x128xf32, #tpu.memory_space<vmem>>, vector<1x64x128xf32>
      %177 = vector.shape_cast %176 : vector<1x64x128xf32> to vector<64x128xf32>
      %178 = arith.truncf %177 : vector<64x128xf32> to vector<64x128xbf16>
      %cst_101 = arith.constant dense<0.000000e+00> : vector<64x128xf32>
      %179 = tpu.matmul %178, %151, %cst_101 {dimension_numbers = #tpu.dot_dimension_numbers<[1], [0], [0], [1], [0, 0, 1, 1], [], []>} : vector<64x128xbf16>, vector<128x128xbf16>, vector<64x128xf32> -> vector<64x128xf32>
      %180 = vector.broadcast %152 : vector<1x128xf32> to vector<64x128xf32>
      %181 = arith.addf %179, %180 : vector<64x128xf32>
      %182 = math.tanh %181 : vector<64x128xf32>
      %183 = vector.broadcast %153 : vector<1x128xf32> to vector<64x128xf32>
      %184 = arith.mulf %182, %183 : vector<64x128xf32>
      %cst_102 = arith.constant dense<0.000000e+00> : vector<64xf32>
      %185 = vector.multi_reduction <add>, %184, %cst_102 [1] : vector<64x128xf32> to vector<64xf32>
      %186 = vector.shape_cast %185 : vector<64xf32> to vector<64x1xf32>
      %187 = arith.maximumf %164, %175 : vector<64x1xf32>
      %188 = arith.maximumf %187, %186 : vector<64x1xf32>
      %189 = arith.subf %164, %188 : vector<64x1xf32>
      %190 = math.exp %189 : vector<64x1xf32>
      %191 = arith.subf %175, %188 : vector<64x1xf32>
      %192 = math.exp %191 : vector<64x1xf32>
      %193 = arith.subf %186, %188 : vector<64x1xf32>
      %194 = math.exp %193 : vector<64x1xf32>
      %195 = arith.addf %190, %192 : vector<64x1xf32>
      %196 = arith.addf %195, %194 : vector<64x1xf32>
      %cst_103 = arith.constant 1.000000e+00 : f32
      %197 = vector.broadcast %cst_103 : f32 to vector<64x1xf32>
      %198 = arith.divf %197, %196 : vector<64x1xf32>
      %199 = arith.mulf %190, %198 : vector<64x1xf32>
      %c0_104 = arith.constant 0 : index
      %c0_105 = arith.constant 0 : index
      %c0_106 = arith.constant 0 : index
      %200 = vector.load %arg13[%c0_104, %c0_105, %c0_106] : memref<3x64x128xf32, #tpu.memory_space<vmem>>, vector<1x64x128xf32>
      %201 = vector.shape_cast %200 : vector<1x64x128xf32> to vector<64x128xf32>
      %202 = vector.broadcast %199 : vector<64x1xf32> to vector<64x128xf32>
      %203 = arith.mulf %202, %201 : vector<64x128xf32>
      %204 = arith.mulf %192, %198 : vector<64x1xf32>
      %c1_107 = arith.constant 1 : index
      %c0_108 = arith.constant 0 : index
      %c0_109 = arith.constant 0 : index
      %205 = vector.load %arg13[%c1_107, %c0_108, %c0_109] : memref<3x64x128xf32, #tpu.memory_space<vmem>>, vector<1x64x128xf32>
      %206 = vector.shape_cast %205 : vector<1x64x128xf32> to vector<64x128xf32>
      %207 = vector.broadcast %204 : vector<64x1xf32> to vector<64x128xf32>
      %208 = arith.mulf %207, %206 : vector<64x128xf32>
      %209 = arith.addf %203, %208 : vector<64x128xf32>
      %210 = arith.mulf %194, %198 : vector<64x1xf32>
      %c2_110 = arith.constant 2 : index
      %c0_111 = arith.constant 0 : index
      %c0_112 = arith.constant 0 : index
      %211 = vector.load %arg13[%c2_110, %c0_111, %c0_112] : memref<3x64x128xf32, #tpu.memory_space<vmem>>, vector<1x64x128xf32>
      %212 = vector.shape_cast %211 : vector<1x64x128xf32> to vector<64x128xf32>
      %213 = vector.broadcast %210 : vector<64x1xf32> to vector<64x128xf32>
      %214 = arith.mulf %213, %212 : vector<64x128xf32>
      %215 = arith.addf %209, %214 : vector<64x128xf32>
      %c0_113 = arith.constant 0 : index
      %c0_114 = arith.constant 0 : index
      %216 = vector.load %arg12[%c0_113, %c0_114] : memref<64x128xf32, #tpu.memory_space<vmem>>, vector<64x128xf32>
      tpu.vector_store %arg12[%c0_113, %c0_114], %215 {strides = array<i32>} : memref<64x128xf32, #tpu.memory_space<vmem>>, vector<64x128xf32>,
    } else {
    }
    return
  }
  func.func @transform_0(%arg0: i32, %arg1: i32) -> (i32, i32, i32) {
    %c0_i32 = arith.constant 0 : i32
    %c0_i32_0 = arith.constant 0 : i32
    return %arg1, %arg0, %c0_i32 : i32, i32, i32
  }
  func.func @transform_1(%arg0: i32, %arg1: i32) -> (i32, i32, i32, i32) {
    %c0_i32 = arith.constant 0 : i32
    %c0_i32_0 = arith.constant 0 : i32
    %c0_i32_1 = arith.constant 0 : i32
    %c0_i32_2 = arith.constant 0 : i32
    return %arg1, %c0_i32, %c0_i32_0, %c0_i32_1 : i32, i32, i32, i32
  }
  func.func @transform_2(%arg0: i32, %arg1: i32) -> (i32, i32, i32, i32) {
    %c0_i32 = arith.constant 0 : i32
    %c0_i32_0 = arith.constant 0 : i32
    %c0_i32_1 = arith.constant 0 : i32
    %c0_i32_2 = arith.constant 0 : i32
    return %arg1, %c0_i32, %c0_i32_0, %c0_i32_1 : i32, i32, i32, i32
  }
  func.func @transform_3(%arg0: i32, %arg1: i32) -> (i32, i32, i32, i32) {
    %c0_i32 = arith.constant 0 : i32
    %c0_i32_0 = arith.constant 0 : i32
    %c0_i32_1 = arith.constant 0 : i32
    return %arg1, %c0_i32, %arg0, %c0_i32_0 : i32, i32, i32, i32
  }
  func.func @transform_4(%arg0: i32, %arg1: i32) -> (i32, i32, i32) {
    %c0_i32 = arith.constant 0 : i32
    %c0_i32_0 = arith.constant 0 : i32
    %c0_i32_1 = arith.constant 0 : i32
    return %arg1, %c0_i32, %c0_i32_0 : i32, i32, i32
  }
  func.func @transform_5(%arg0: i32, %arg1: i32) -> (i32, i32) {
    %c0_i32 = arith.constant 0 : i32
    %c0_i32_0 = arith.constant 0 : i32
    %c0_i32_1 = arith.constant 0 : i32
    return %c0_i32, %c0_i32_0 : i32, i32
  }
  func.func @transform_6(%arg0: i32, %arg1: i32) -> (i32, i32) {
    %c0_i32 = arith.constant 0 : i32
    %c0_i32_0 = arith.constant 0 : i32
    %c0_i32_1 = arith.constant 0 : i32
    return %c0_i32, %c0_i32_0 : i32, i32
  }
  func.func @transform_7(%arg0: i32, %arg1: i32) -> (i32, i32) {
    %c0_i32 = arith.constant 0 : i32
    %c0_i32_0 = arith.constant 0 : i32
    %c0_i32_1 = arith.constant 0 : i32
    return %c0_i32, %c0_i32_0 : i32, i32
  }
  func.func @transform_8(%arg0: i32, %arg1: i32) -> (i32, i32) {
    %c0_i32 = arith.constant 0 : i32
    %c0_i32_0 = arith.constant 0 : i32
    %c0_i32_1 = arith.constant 0 : i32
    return %c0_i32, %c0_i32_0 : i32, i32
  }
  func.func @transform_9(%arg0: i32, %arg1: i32) -> (i32, i32) {
    %c0_i32 = arith.constant 0 : i32
    %c0_i32_0 = arith.constant 0 : i32
    %c0_i32_1 = arith.constant 0 : i32
    return %c0_i32, %c0_i32_0 : i32, i32
  }
  func.func @transform_10(%arg0: i32, %arg1: i32) -> (i32, i32) {
    %c0_i32 = arith.constant 0 : i32
    %c0_i32_0 = arith.constant 0 : i32
    return %arg0, %c0_i32 : i32, i32
  }
}

</mosaic_0001>

<llo_original>
// kernel: tpu_custom_call.1
$region0: #{tpu_custom_call.1}
  #allocation0 [shape = 'u32[]', space=smem, size = 0x4, offset = 0x4, fixed_abs, tag = 'smem constant byte address 0x4 - core index']
  #allocation1 [shape = 'u32[72,128]{1,0:T(1,128)}', space=vmem, size = 0x9000, scoped, tag = 'internal scratch']
  #allocation2 [shape = 'f32[3,64,128]{2,1,0:T(8,128)}', space=vmem, size = 0x18000, scoped, tag = 'scratch operand']
  %s0 = inlined_call_operand.vmem [shape: bf16[3,128,128], index: 0, kind: input, shape index: {}]
  %s1 = inlined_call_operand.vmem [shape: bf16[3,4,128,32], index: 1, kind: input, shape index: {}]
  %s2 = inlined_call_operand.vmem [shape: f32[3,4,1,128], index: 2, kind: input, shape index: {}]
  %s3 = inlined_call_operand.vmem [shape: f32[3,4,128,1], index: 3, kind: input, shape index: {}]
  %s4 = inlined_call_operand.vmem [shape: f32[3,1,128], index: 4, kind: input, shape index: {}]
  %s5 = inlined_call_operand.vmem [shape: f32[1,128], index: 5, kind: input, shape index: {}]
  %s6 = inlined_call_operand.vmem [shape: f32[1,128], index: 6, kind: input, shape index: {}]
  %s7 = inlined_call_operand.vmem [shape: bf16[128,128], index: 7, kind: input, shape index: {}]
  %s8 = inlined_call_operand.vmem [shape: f32[1,128], index: 8, kind: input, shape index: {}]
  %s9 = inlined_call_operand.vmem [shape: f32[1,128], index: 9, kind: input, shape index: {}]
  %s10 = inlined_call_operand.hbm [shape: f32[128,128], index: 10, kind: output, shape index: {}]
  %s11 = sld [smem:[#allocation0]]
  $region115: #{tpu_custom_call.1} parent=0
    _
  %s13 = ssub.s32 1, %s11
  %s14 = scalar_select 0, %s13, %s11
  $region1: #{tpu_custom_call.1} parent=0
    #allocation3 [shape = 'u8[262144]{0}', space=vmem, size = 0x40000, scoped, tag = 'input window, operand 3']
    #allocation4 [shape = 'u8[65536]{0}', space=vmem, size = 0x10000, scoped, tag = 'output window, operand 0']
    #allocation5 [shape = 's32[2]{0}', space=sflag, size = 0x8, scoped, tag = 'scoped memory for tpu_custom_call.1']
    %15 = vsyncpa [#allocation5], 0
    %s16 = scalar_lea.sflag [#allocation5], 1
    %17 = vsyncpa %s16, 0
    loop: start=0, step=1, limit=8
    $region2: #{tpu_custom_call.1} parent=1 // loop_pre_header
      _
    $region3: #{tpu_custom_call.1} parent=1 // loop_header
      %s19 = sphi 0, %s23
      %p20 = scmp.ge.s32.totalorder %s19, 8
      %s26 = sphi 0, %s38
      %s27 = sphi 0, %s34
      %s28 = sphi 0, %s26
      %s29 = sphi 0, %s27
      %s30 = sphi 0, %s28
      %s31 = sphi 0, %s29
      %s43 = sphi 0, %s45
      %s46 = sphi 0, %s43
      %s47 = sphi 0, %s46
      %s63 = sphi 0, %s47
      %s69 = sphi 0, %s71
      %s72 = sphi 0, %s69
      %s73 = sphi 0, %s72
      %s89 = sphi 0, %s73
      %s95 = sphi 0, %s97
      %s98 = sphi 0, %s95
      %s99 = sphi 0, %s98
      %s115 = sphi 0, %s99
      %s123 = sphi 0, %s125
      %s126 = sphi 0, %s123
      %s127 = sphi 0, %s126
      %s143 = sphi 0, %s127
      %s149 = sphi 0, %s151
      %s152 = sphi 0, %s149
      %s153 = sphi 0, %s152
      %s169 = sphi 0, %s153
      %s173 = sphi 0, %s173
      %s175 = sphi 0, %s173
      %s176 = sphi 0, %s175
      %s190 = sphi 0, %s176
      %s194 = sphi 0, %s194
      %s196 = sphi 0, %s194
      %s197 = sphi 0, %s196
      %s211 = sphi 0, %s197
      %s215 = sphi 0, %s215
      %s217 = sphi 0, %s215
      %s218 = sphi 0, %s217
      %s232 = sphi 0, %s218
      %s236 = sphi 0, %s236
      %s238 = sphi 0, %s236
      %s239 = sphi 0, %s238
      %s253 = sphi 0, %s239
      %s257 = sphi 0, %s257
      %s259 = sphi 0, %s257
      %s260 = sphi 0, %s259
      %s274 = sphi 0, %s260
      %s280 = sphi 0, %s282
      %s283 = sphi 0, %s280
      %s284 = sphi 0, %s283
      %s300 = sphi 0, %s284
    $region4: #{tpu_custom_call.1} parent=1 // loop_header_branch
      %22 = sbr.rel (%p20) target = $region8
    $region5: #{tpu_custom_call.1} parent=1 // loop_body
      %s24 = ssub.s32 %s19, 1
      %s25 = ssub.s32 %s19, 2
      %s32 = sadd.s32 1, %s27
      %p33 = scmp.ge.s32.totalorder %s32, 3
      %s34 = scalar_select %p33, 0, %s32
      %s35 = sadd.s32 1, %s26
      %s36 = scalar_select %p33, %s35, %s26
      %p37 = scmp.ge.s32.totalorder %s36, 2
      %s38 = scalar_select %p37, 0, %s36
      %s39 = ssub.s32 %s27, %s34
      %s40 = ssub.s32 %s26, %s38
      %s41 = sor.u32 %s39, %s40
      %p42 = scmp.eq.s32.totalorder %s41, 0
      %s44 = sadd.s32 %s43, 1
      %s45 = scalar_select %p42, %s43, %s44
      %p48 = pneg %p42
      %p49 = scmp.eq.s32.totalorder %s19, 5
      %p50 = por %p48, %p49
      %p51 = scmp.ne.s32.totalorder %s43, %s46
      %p52 = scmp.eq.s32.totalorder %s19, 0
      %p53 = por %p51, %p52
      %p54 = scmp.ne.s32.totalorder %s43, %s46
      %p55 = scmp.eq.s32.totalorder %s24, 5
      %p56 = por %p54, %p55
      %p57 = scmp.ne.s32.totalorder %s46, %s47
      %p58 = scmp.eq.s32.totalorder %s24, 0
      %p59 = por %p57, %p58
      %p60 = scmp.ne.s32.totalorder %s46, %s47
      %p61 = scmp.eq.s32.totalorder %s25, 5
      %p62 = por %p60, %p61
      %p64 = scmp.ne.s32.totalorder %s47, %s63
      %p65 = scmp.eq.s32.totalorder %s25, 0
      %p66 = por %p64, %p65
      %s67 = ssub.s32 %s27, %s34
      %p68 = scmp.eq.s32.totalorder %s67, 0
      %s70 = sadd.s32 %s69, 1
      %s71 = scalar_select %p68, %s69, %s70
      %p74 = pneg %p68
      %p75 = scmp.eq.s32.totalorder %s19, 5
      %p76 = por %p74, %p75
      %p77 = scmp.ne.s32.totalorder %s69, %s72
      %p78 = scmp.eq.s32.totalorder %s19, 0
      %p79 = por %p77, %p78
      %p80 = scmp.ne.s32.totalorder %s69, %s72
      %p81 = scmp.eq.s32.totalorder %s24, 5
      %p82 = por %p80, %p81
      %p83 = scmp.ne.s32.totalorder %s72, %s73
      %p84 = scmp.eq.s32.totalorder %s24, 0
      %p85 = por %p83, %p84
      %p86 = scmp.ne.s32.totalorder %s72, %s73
      %p87 = scmp.eq.s32.totalorder %s25, 5
      %p88 = por %p86, %p87
      %p90 = scmp.ne.s32.totalorder %s73, %s89
      %p91 = scmp.eq.s32.totalorder %s25, 0
      %p92 = por %p90, %p91
      %s93 = ssub.s32 %s27, %s34
      %p94 = scmp.eq.s32.totalorder %s93, 0
      %s96 = sadd.s32 %s95, 1
      %s97 = scalar_select %p94, %s95, %s96
      %p100 = pneg %p94
      %p101 = scmp.eq.s32.totalorder %s19, 5
      %p102 = por %p100, %p101
      %p103 = scmp.ne.s32.totalorder %s95, %s98
      %p104 = scmp.eq.s32.totalorder %s19, 0
      %p105 = por %p103, %p104
      %p106 = scmp.ne.s32.totalorder %s95, %s98
      %p107 = scmp.eq.s32.totalorder %s24, 5
      %p108 = por %p106, %p107
      %p109 = scmp.ne.s32.totalorder %s98, %s99
      %p110 = scmp.eq.s32.totalorder %s24, 0
      %p111 = por %p109, %p110
      %p112 = scmp.ne.s32.totalorder %s98, %s99
      %p113 = scmp.eq.s32.totalorder %s25, 5
      %p114 = por %p112, %p113
      %p116 = scmp.ne.s32.totalorder %s99, %s115
      %p117 = scmp.eq.s32.totalorder %s25, 0
      %p118 = por %p116, %p117
      %s119 = ssub.s32 %s27, %s34
      %s120 = ssub.s32 %s26, %s38
      %s121 = sor.u32 %s119, %s120
      %p122 = scmp.eq.s32.totalorder %s121, 0
      %s124 = sadd.s32 %s123, 1
      %s125 = scalar_select %p122, %s123, %s124
      %p128 = pneg %p122
      %p129 = scmp.eq.s32.totalorder %s19, 5
      %p130 = por %p128, %p129
      %p131 = scmp.ne.s32.totalorder %s123, %s126
      %p132 = scmp.eq.s32.totalorder %s19, 0
      %p133 = por %p131, %p132
      %p134 = scmp.ne.s32.totalorder %s123, %s126
      %p135 = scmp.eq.s32.totalorder %s24, 5
      %p136 = por %p134, %p135
      %p137 = scmp.ne.s32.totalorder %s126, %s127
      %p138 = scmp.eq.s32.totalorder %s24, 0
      %p139 = por %p137, %p138
      %p140 = scmp.ne.s32.totalorder %s126, %s127
      %p141 = scmp.eq.s32.totalorder %s25, 5
      %p142 = por %p140, %p141
      %p144 = scmp.ne.s32.totalorder %s127, %s143
      %p145 = scmp.eq.s32.totalorder %s25, 0
      %p146 = por %p144, %p145
      %s147 = ssub.s32 %s27, %s34
      %p148 = scmp.eq.s32.totalorder %s147, 0
      %s150 = sadd.s32 %s149, 1
      %s151 = scalar_select %p148, %s149, %s150
      %p154 = pneg %p148
      %p155 = scmp.eq.s32.totalorder %s19, 5
      %p156 = por %p154, %p155
      %p157 = scmp.ne.s32.totalorder %s149, %s152
      %p158 = scmp.eq.s32.totalorder %s19, 0
      %p159 = por %p157, %p158
      %p160 = scmp.ne.s32.totalorder %s149, %s152
      %p161 = scmp.eq.s32.totalorder %s24, 5
      %p162 = por %p160, %p161
      %p163 = scmp.ne.s32.totalorder %s152, %s153
      %p164 = scmp.eq.s32.totalorder %s24, 0
      %p165 = por %p163, %p164
      %p166 = scmp.ne.s32.totalorder %s152, %s153
      %p167 = scmp.eq.s32.totalorder %s25, 5
      %p168 = por %p166, %p167
      %p170 = scmp.ne.s32.totalorder %s153, %s169
      %p171 = scmp.eq.s32.totalorder %s25, 0
      %p172 = por %p170, %p171
      %s174 = sadd.s32 %s173, 1
      %p177 = scmp.eq.s32.totalorder %s19, 5
      %p178 = scmp.ne.s32.totalorder %s173, %s175
      %p179 = scmp.eq.s32.totalorder %s19, 0
      %p180 = por %p178, %p179
      %p181 = scmp.ne.s32.totalorder %s173, %s175
      %p182 = scmp.eq.s32.totalorder %s24, 5
      %p183 = por %p181, %p182
      %p184 = scmp.ne.s32.totalorder %s175, %s176
      %p185 = scmp.eq.s32.totalorder %s24, 0
      %p186 = por %p184, %p185
      %p187 = scmp.ne.s32.totalorder %s175, %s176
      %p188 = scmp.eq.s32.totalorder %s25, 5
      %p189 = por %p187, %p188
      %p191 = scmp.ne.s32.totalorder %s176, %s190
      %p192 = scmp.eq.s32.totalorder %s25, 0
      %p193 = por %p191, %p192
      %s195 = sadd.s32 %s194, 1
      %p198 = scmp.eq.s32.totalorder %s19, 5
      %p199 = scmp.ne.s32.totalorder %s194, %s196
      %p200 = scmp.eq.s32.totalorder %s19, 0
      %p201 = por %p199, %p200
      %p202 = scmp.ne.s32.totalorder %s194, %s196
      %p203 = scmp.eq.s32.totalorder %s24, 5
      %p204 = por %p202, %p203
      %p205 = scmp.ne.s32.totalorder %s196, %s197
      %p206 = scmp.eq.s32.totalorder %s24, 0
      %p207 = por %p205, %p206
      %p208 = scmp.ne.s32.totalorder %s196, %s197
      %p209 = scmp.eq.s32.totalorder %s25, 5
      %p210 = por %p208, %p209
      %p212 = scmp.ne.s32.totalorder %s197, %s211
      %p213 = scmp.eq.s32.totalorder %s25, 0
      %p214 = por %p212, %p213
      %s216 = sadd.s32 %s215, 1
      %p219 = scmp.eq.s32.totalorder %s19, 5
      %p220 = scmp.ne.s32.totalorder %s215, %s217
      %p221 = scmp.eq.s32.totalorder %s19, 0
      %p222 = por %p220, %p221
      %p223 = scmp.ne.s32.totalorder %s215, %s217
      %p224 = scmp.eq.s32.totalorder %s24, 5
      %p225 = por %p223, %p224
      %p226 = scmp.ne.s32.totalorder %s217, %s218
      %p227 = scmp.eq.s32.totalorder %s24, 0
      %p228 = por %p226, %p227
      %p229 = scmp.ne.s32.totalorder %s217, %s218
      %p230 = scmp.eq.s32.totalorder %s25, 5
      %p231 = por %p229, %p230
      %p233 = scmp.ne.s32.totalorder %s218, %s232
      %p234 = scmp.eq.s32.totalorder %s25, 0
      %p235 = por %p233, %p234
      %s237 = sadd.s32 %s236, 1
      %p240 = scmp.eq.s32.totalorder %s19, 5
      %p241 = scmp.ne.s32.totalorder %s236, %s238
      %p242 = scmp.eq.s32.totalorder %s19, 0
      %p243 = por %p241, %p242
      %p244 = scmp.ne.s32.totalorder %s236, %s238
      %p245 = scmp.eq.s32.totalorder %s24, 5
      %p246 = por %p244, %p245
      %p247 = scmp.ne.s32.totalorder %s238, %s239
      %p248 = scmp.eq.s32.totalorder %s24, 0
      %p249 = por %p247, %p248
      %p250 = scmp.ne.s32.totalorder %s238, %s239
      %p251 = scmp.eq.s32.totalorder %s25, 5
      %p252 = por %p250, %p251
      %p254 = scmp.ne.s32.totalorder %s239, %s253
      %p255 = scmp.eq.s32.totalorder %s25, 0
      %p256 = por %p254, %p255
      %s258 = sadd.s32 %s257, 1
      %p261 = scmp.eq.s32.totalorder %s19, 5
      %p262 = scmp.ne.s32.totalorder %s257, %s259
      %p263 = scmp.eq.s32.totalorder %s19, 0
      %p264 = por %p262, %p263
      %p265 = scmp.ne.s32.totalorder %s257, %s259
      %p266 = scmp.eq.s32.totalorder %s24, 5
      %p267 = por %p265, %p266
      %p268 = scmp.ne.s32.totalorder %s259, %s260
      %p269 = scmp.eq.s32.totalorder %s24, 0
      %p270 = por %p268, %p269
      %p271 = scmp.ne.s32.totalorder %s259, %s260
      %p272 = scmp.eq.s32.totalorder %s25, 5
      %p273 = por %p271, %p272
      %p275 = scmp.ne.s32.totalorder %s260, %s274
      %p276 = scmp.eq.s32.totalorder %s25, 0
      %p277 = por %p275, %p276
      %s278 = ssub.s32 %s26, %s38
      %p279 = scmp.eq.s32.totalorder %s278, 0
      %s281 = sadd.s32 %s280, 1
      %s282 = scalar_select %p279, %s280, %s281
      %p285 = pneg %p279
      %p286 = scmp.eq.s32.totalorder %s19, 5
      %p287 = por %p285, %p286
      %p288 = scmp.ne.s32.totalorder %s280, %s283
      %p289 = scmp.eq.s32.totalorder %s19, 0
      %p290 = por %p288, %p289
      %p291 = scmp.ne.s32.totalorder %s280, %s283
      %p292 = scmp.eq.s32.totalorder %s24, 5
      %p293 = por %p291, %p292
      %p294 = scmp.ne.s32.totalorder %s283, %s284
      %p295 = scmp.eq.s32.totalorder %s24, 0
      %p296 = por %p294, %p295
      %p297 = scmp.ne.s32.totalorder %s283, %s284
      %p298 = scmp.eq.s32.totalorder %s25, 5
      %p299 = por %p297, %p298
      %p301 = scmp.ne.s32.totalorder %s284, %s300
      %p302 = scmp.eq.s32.totalorder %s25, 0
      %p303 = por %p301, %p302
      %p304 = scmp.le.s32.totalorder 1, %s19
      %p305 = scmp.lt.s32.totalorder %s19, 7
      %p306 = pnand %p304, %p305
      %p307 = pneg %p306
      // Predicated region
      $region9: #{tpu_custom_call.1} parent=5 // pred_check
        _
      $region10: #{tpu_custom_call.1} parent=5 // pred_check_branch
        %309 = sbr.rel (%p306) target = $region12
      $region11: #{tpu_custom_call.1} parent=5 // pred_region
        %s310 = ssub.s32 %s19, 1
        // Predicated region
        $region13: #{tpu_custom_call.1} parent=11 // pred_check
          %p311 = pneg %p186
        $region14: #{tpu_custom_call.1} parent=11 // pred_check_branch
          %313 = sbr.rel (%p311) target = $region16
        $region15: #{tpu_custom_call.1} parent=11 // pred_region
          _
        $region16: #{tpu_custom_call.1} parent=11 // pred_fallthru
          _
        // Predicated region
        $region17: #{tpu_custom_call.1} parent=11 // pred_check
          %p314 = pneg %p207
        $region18: #{tpu_custom_call.1} parent=11 // pred_check_branch
          %316 = sbr.rel (%p314) target = $region20
        $region19: #{tpu_custom_call.1} parent=11 // pred_region
          _
        $region20: #{tpu_custom_call.1} parent=11 // pred_fallthru
          _
        // Predicated region
        $region21: #{tpu_custom_call.1} parent=11 // pred_check
          %p317 = pneg %p228
        $region22: #{tpu_custom_call.1} parent=11 // pred_check_branch
          %319 = sbr.rel (%p317) target = $region24
        $region23: #{tpu_custom_call.1} parent=11 // pred_region
          _
        $region24: #{tpu_custom_call.1} parent=11 // pred_fallthru
          _
        // Predicated region
        $region25: #{tpu_custom_call.1} parent=11 // pred_check
          %p320 = pneg %p249
        $region26: #{tpu_custom_call.1} parent=11 // pred_check_branch
          %322 = sbr.rel (%p320) target = $region28
        $region27: #{tpu_custom_call.1} parent=11 // pred_region
          _
        $region28: #{tpu_custom_call.1} parent=11 // pred_fallthru
          _
        // Predicated region
        $region29: #{tpu_custom_call.1} parent=11 // pred_check
          %p323 = pneg %p270
        $region30: #{tpu_custom_call.1} parent=11 // pred_check_branch
          %325 = sbr.rel (%p323) target = $region32
        $region31: #{tpu_custom_call.1} parent=11 // pred_region
          _
        $region32: #{tpu_custom_call.1} parent=11 // pred_fallthru
          _
      $region12: #{tpu_custom_call.1} parent=5 // pred_fallthru
        _
      %p326 = scmp.lt.s32.totalorder %s19, 6
      // Predicated region
      $region33: #{tpu_custom_call.1} parent=5 // pred_check
        %p327 = pneg %p326
      $region34: #{tpu_custom_call.1} parent=5 // pred_check_branch
        %329 = sbr.rel (%p327) target = $region36
      $region35: #{tpu_custom_call.1} parent=5 // pred_region
        // Predicated region
        $region37: #{tpu_custom_call.1} parent=35 // pred_check
          %p330 = pneg %p53
        $region38: #{tpu_custom_call.1} parent=35 // pred_check_branch
          %332 = sbr.rel (%p330) target = $region40
        $region39: #{tpu_custom_call.1} parent=35 // pred_region
          %s333 = smul.u32 8, %s26
          %p334 = scmp.lt.s32.totalorder %s27, 2
          %s335 = scalar_select %p334, %s27, 2
          %p336 = scmp.lt.s32.totalorder %s333, 15
          %s337 = scalar_select %p336, %s333, 15
          %s338 = smul.addr %s335, 16
          %s339 = sadd.s32 %s337, %s338
          %s340 = smul.addr %s339, 4
          %s341 = scalar_lea.vmem %s0, %s340
          %s342 = smul.u32 8, %s26
        $region40: #{tpu_custom_call.1} parent=35 // pred_fallthru
          _
        // Predicated region
        $region41: #{tpu_custom_call.1} parent=35 // pred_check
          %p343 = pneg %p79
        $region42: #{tpu_custom_call.1} parent=35 // pred_check_branch
          %345 = sbr.rel (%p343) target = $region44
        $region43: #{tpu_custom_call.1} parent=35 // pred_region
          %p346 = scmp.lt.s32.totalorder %s27, 2
          %s347 = scalar_select %p346, %s27, 2
          %s348 = smul.addr %s347, 64
          %s349 = smul.addr %s348, 4
          %s350 = scalar_lea.vmem %s1, %s349
        $region44: #{tpu_custom_call.1} parent=35 // pred_fallthru
          _
        // Predicated region
        $region45: #{tpu_custom_call.1} parent=35 // pred_check
          %p351 = pneg %p105
        $region46: #{tpu_custom_call.1} parent=35 // pred_check_branch
          %353 = sbr.rel (%p351) target = $region48
        $region47: #{tpu_custom_call.1} parent=35 // pred_region
          %p354 = scmp.lt.s32.totalorder %s27, 2
          %s355 = scalar_select %p354, %s27, 2
          %s356 = smul.addr %s355, 4
          %s357 = scalar_lea.vmem %s2, %s356
        $region48: #{tpu_custom_call.1} parent=35 // pred_fallthru
          _
        // Predicated region
        $region49: #{tpu_custom_call.1} parent=35 // pred_check
          %p358 = pneg %p133
        $region50: #{tpu_custom_call.1} parent=35 // pred_check_branch
          %360 = sbr.rel (%p358) target = $region52
        $region51: #{tpu_custom_call.1} parent=35 // pred_region
          %s361 = sand.u32 %s123, 1
          %s362 = sand.u32 %s123, 1
          %s363 = smul.addr %s362, 256
          %s364 = scalar_lea.vmem [#allocation3], %s363
          %s365 = smul.u32 8, %s26
          %s366 = smul.addr %s27, 64
          %s367 = sadd.s32 %s365, %s366
          %s368 = smul.addr %s367, 8
          %s369 = scalar_lea.vmem %s3, %s368
          // Predicated region
          $region53: #{tpu_custom_call.1} parent=51 // pred_check
            _
          $region54: #{tpu_custom_call.1} parent=51 // pred_check_branch
            %371 = sbr.rel (0) target = $region56
          $region55: #{tpu_custom_call.1} parent=51 // pred_region
            // Predicated region
            $region57: #{tpu_custom_call.1} parent=55 // pred_check
              _
            $region58: #{tpu_custom_call.1} parent=55 // pred_check_branch
              %373 = sbr.rel (0) target = $region60
            $region59: #{tpu_custom_call.1} parent=55 // pred_region
              // Predicated region
              $region72: #{tpu_custom_call.1} parent=59 // pred_check
                _
              $region73: #{tpu_custom_call.1} parent=59 // pred_check_branch
                %451 = sbr.rel (0) target = $region75
              $region74: #{tpu_custom_call.1} parent=59 // pred_region
                loop: start=0, step=1, limit=1
                $region76: #{tpu_custom_call.1} parent=74 // loop_pre_header
                  _
                $region77: #{tpu_custom_call.1} parent=74 // loop_header
                  %s453 = sphi 0, %s457
                  %p454 = scmp.ge.s32.totalorder %s453, 1
                  %s458 = sphi %s369, %s369
                  %s459 = sphi %s364, %s364
                $region78: #{tpu_custom_call.1} parent=74 // loop_header_branch
                  %456 = sbr.rel (%p454) target = $region82
                $region79: #{tpu_custom_call.1} parent=74 // loop_body
                  %v460 = vld [vmem:[%s458] sm:$0xff]
                  %461 = vst [vmem:[%s459] sm:$0xff] %v460
                  %v462 = vld [vmem:[%s458 + $0x8] sm:$0xff]
                  %463 = vst [vmem:[%s459 + $0x8] sm:$0xff] %v462
                  %v464 = vld [vmem:[%s458 + $0x10] sm:$0xff]
                  %465 = vst [vmem:[%s459 + $0x10] sm:$0xff] %v464
                  %v466 = vld [vmem:[%s458 + $0x18] sm:$0xff]
                  %467 = vst [vmem:[%s459 + $0x18] sm:$0xff] %v466
                  %v468 = vld [vmem:[%s458 + $0x20] sm:$0xff]
                  %469 = vst [vmem:[%s459 + $0x20] sm:$0xff] %v468
                  %v470 = vld [vmem:[%s458 + $0x28] sm:$0xff]
                  %471 = vst [vmem:[%s459 + $0x28] sm:$0xff] %v470
                  %v472 = vld [vmem:[%s458 + $0x30] sm:$0xff]
                  %473 = vst [vmem:[%s459 + $0x30] sm:$0xff] %v472
                  %v474 = vld [vmem:[%s458 + $0x38] sm:$0xff]
                  %475 = vst [vmem:[%s459 + $0x38] sm:$0xff] %v474
                  %v476 = vld [vmem:[%s458 + $0x80] sm:$0xff]
                  %477 = vst [vmem:[%s459 + $0x40] sm:$0xff] %v476
                  %v478 = vld [vmem:[%s458 + $0x88] sm:$0xff]
                  %479 = vst [vmem:[%s459 + $0x48] sm:$0xff] %v478
                  %v480 = vld [vmem:[%s458 + $0x90] sm:$0xff]
                  %481 = vst [vmem:[%s459 + $0x50] sm:$0xff] %v480
                  %v482 = vld [vmem:[%s458 + $0x98] sm:$0xff]
                  %483 = vst [vmem:[%s459 + $0x58] sm:$0xff] %v482
                  %v484 = vld [vmem:[%s458 + $0xa0] sm:$0xff]
                  %485 = vst [vmem:[%s459 + $0x60] sm:$0xff] %v484
                  %v486 = vld [vmem:[%s458 + $0xa8] sm:$0xff]
                  %487 = vst [vmem:[%s459 + $0x68] sm:$0xff] %v486
                  %v488 = vld [vmem:[%s458 + $0xb0] sm:$0xff]
                  %489 = vst [vmem:[%s459 + $0x70] sm:$0xff] %v488
                  %v490 = vld [vmem:[%s458 + $0xb8] sm:$0xff]
                  %491 = vst [vmem:[%s459 + $0x78] sm:$0xff] %v490
                  %v492 = vld [vmem:[%s458 + $0x100] sm:$0xff]
                  %493 = vst [vmem:[%s459 + $0x80] sm:$0xff] %v492
                  %v494 = vld [vmem:[%s458 + $0x108] sm:$0xff]
                  %495 = vst [vmem:[%s459 + $0x88] sm:$0xff] %v494
                  %v496 = vld [vmem:[%s458 + $0x110] sm:$0xff]
                  %497 = vst [vmem:[%s459 + $0x90] sm:$0xff] %v496
                  %v498 = vld [vmem:[%s458 + $0x118] sm:$0xff]
                  %499 = vst [vmem:[%s459 + $0x98] sm:$0xff] %v498
                  %v500 = vld [vmem:[%s458 + $0x120] sm:$0xff]
                  %501 = vst [vmem:[%s459 + $0xa0] sm:$0xff] %v500
                  %v502 = vld [vmem:[%s458 + $0x128] sm:$0xff]
                  %503 = vst [vmem:[%s459 + $0xa8] sm:$0xff] %v502
                  %v504 = vld [vmem:[%s458 + $0x130] sm:$0xff]
                  %505 = vst [vmem:[%s459 + $0xb0] sm:$0xff] %v504
                  %v506 = vld [vmem:[%s458 + $0x138] sm:$0xff]
                  %507 = vst [vmem:[%s459 + $0xb8] sm:$0xff] %v506
                  %v508 = vld [vmem:[%s458 + $0x180] sm:$0xff]
                  %509 = vst [vmem:[%s459 + $0xc0] sm:$0xff] %v508
                  %v510 = vld [vmem:[%s458 + $0x188] sm:$0xff]
                  %511 = vst [vmem:[%s459 + $0xc8] sm:$0xff] %v510
                  %v512 = vld [vmem:[%s458 + $0x190] sm:$0xff]
                  %513 = vst [vmem:[%s459 + $0xd0] sm:$0xff] %v512
                  %v514 = vld [vmem:[%s458 + $0x198] sm:$0xff]
                  %515 = vst [vmem:[%s459 + $0xd8] sm:$0xff] %v514
                  %v516 = vld [vmem:[%s458 + $0x1a0] sm:$0xff]
                  %517 = vst [vmem:[%s459 + $0xe0] sm:$0xff] %v516
                  %v518 = vld [vmem:[%s458 + $0x1a8] sm:$0xff]
                  %519 = vst [vmem:[%s459 + $0xe8] sm:$0xff] %v518
                  %v520 = vld [vmem:[%s458 + $0x1b0] sm:$0xff]
                  %521 = vst [vmem:[%s459 + $0xf0] sm:$0xff] %v520
                  %v522 = vld [vmem:[%s458 + $0x1b8] sm:$0xff]
                  %523 = vst [vmem:[%s459 + $0xf8] sm:$0xff] %v522
                $region80: #{tpu_custom_call.1} parent=74 // loop_footer
                  %s457 = sadd.s32 1, %s453
                $region81: #{tpu_custom_call.1} parent=74 // loop_footer_branch
                  %452 = sbr.rel target = $region77
                $region82: #{tpu_custom_call.1} parent=74 // loop_exit
                  _
              $region75: #{tpu_custom_call.1} parent=59 // pred_fallthru
                _
              // Predicated region
              $region83: #{tpu_custom_call.1} parent=59 // pred_check
                _
              $region84: #{tpu_custom_call.1} parent=59 // pred_check_branch
                %525 = sbr.rel target = $region86
              $region85: #{tpu_custom_call.1} parent=59 // pred_region
                _
              $region86: #{tpu_custom_call.1} parent=59 // pred_fallthru
                _
            $region60: #{tpu_custom_call.1} parent=55 // pred_fallthru
              _
            // Predicated region
            $region61: #{tpu_custom_call.1} parent=55 // pred_check
              _
            $region62: #{tpu_custom_call.1} parent=55 // pred_check_branch
              %375 = sbr.rel target = $region64
            $region63: #{tpu_custom_call.1} parent=55 // pred_region
              %s377 = ssub.s32 256, 1
              loop: start=0, step=1, limit=1
              $region65: #{tpu_custom_call.1} parent=63 // loop_pre_header
                _
              $region66: #{tpu_custom_call.1} parent=63 // loop_header
                %s379 = sphi 0, %s383
                %p380 = scmp.ge.s32.totalorder %s379, 1
                %s384 = sphi %s369, %s369
                %s385 = sphi %s364, %s364
              $region67: #{tpu_custom_call.1} parent=63 // loop_header_branch
                %382 = sbr.rel (%p380) target = $region71
              $region68: #{tpu_custom_call.1} parent=63 // loop_body
                %v386 = vld [vmem:[%s384] sm:%s377]
                %387 = vst [vmem:[%s385] sm:%s377] %v386
                %v388 = vld [vmem:[%s384 + $0x8] sm:%s377]
                %389 = vst [vmem:[%s385 + $0x8] sm:%s377] %v388
                %v390 = vld [vmem:[%s384 + $0x10] sm:%s377]
                %391 = vst [vmem:[%s385 + $0x10] sm:%s377] %v390
                %v392 = vld [vmem:[%s384 + $0x18] sm:%s377]
                %393 = vst [vmem:[%s385 + $0x18] sm:%s377] %v392
                %v394 = vld [vmem:[%s384 + $0x20] sm:%s377]
                %395 = vst [vmem:[%s385 + $0x20] sm:%s377] %v394
                %v396 = vld [vmem:[%s384 + $0x28] sm:%s377]
                %397 = vst [vmem:[%s385 + $0x28] sm:%s377] %v396
                %v398 = vld [vmem:[%s384 + $0x30] sm:%s377]
                %399 = vst [vmem:[%s385 + $0x30] sm:%s377] %v398
                %v400 = vld [vmem:[%s384 + $0x38] sm:%s377]
                %401 = vst [vmem:[%s385 + $0x38] sm:%s377] %v400
                %v402 = vld [vmem:[%s384 + $0x80] sm:%s377]
                %403 = vst [vmem:[%s385 + $0x40] sm:%s377] %v402
                %v404 = vld [vmem:[%s384 + $0x88] sm:%s377]
                %405 = vst [vmem:[%s385 + $0x48] sm:%s377] %v404
                %v406 = vld [vmem:[%s384 + $0x90] sm:%s377]
                %407 = vst [vmem:[%s385 + $0x50] sm:%s377] %v406
                %v408 = vld [vmem:[%s384 + $0x98] sm:%s377]
                %409 = vst [vmem:[%s385 + $0x58] sm:%s377] %v408
                %v410 = vld [vmem:[%s384 + $0xa0] sm:%s377]
                %411 = vst [vmem:[%s385 + $0x60] sm:%s377] %v410
                %v412 = vld [vmem:[%s384 + $0xa8] sm:%s377]
                %413 = vst [vmem:[%s385 + $0x68] sm:%s377] %v412
                %v414 = vld [vmem:[%s384 + $0xb0] sm:%s377]
                %415 = vst [vmem:[%s385 + $0x70] sm:%s377] %v414
                %v416 = vld [vmem:[%s384 + $0xb8] sm:%s377]
                %417 = vst [vmem:[%s385 + $0x78] sm:%s377] %v416
                %v418 = vld [vmem:[%s384 + $0x100] sm:%s377]
                %419 = vst [vmem:[%s385 + $0x80] sm:%s377] %v418
                %v420 = vld [vmem:[%s384 + $0x108] sm:%s377]
                %421 = vst [vmem:[%s385 + $0x88] sm:%s377] %v420
                %v422 = vld [vmem:[%s384 + $0x110] sm:%s377]
                %423 = vst [vmem:[%s385 + $0x90] sm:%s377] %v422
                %v424 = vld [vmem:[%s384 + $0x118] sm:%s377]
                %425 = vst [vmem:[%s385 + $0x98] sm:%s377] %v424
                %v426 = vld [vmem:[%s384 + $0x120] sm:%s377]
                %427 = vst [vmem:[%s385 + $0xa0] sm:%s377] %v426
                %v428 = vld [vmem:[%s384 + $0x128] sm:%s377]
                %429 = vst [vmem:[%s385 + $0xa8] sm:%s377] %v428
                %v430 = vld [vmem:[%s384 + $0x130] sm:%s377]
                %431 = vst [vmem:[%s385 + $0xb0] sm:%s377] %v430
                %v432 = vld [vmem:[%s384 + $0x138] sm:%s377]
                %433 = vst [vmem:[%s385 + $0xb8] sm:%s377] %v432
                %v434 = vld [vmem:[%s384 + $0x180] sm:%s377]
                %435 = vst [vmem:[%s385 + $0xc0] sm:%s377] %v434
                %v436 = vld [vmem:[%s384 + $0x188] sm:%s377]
                %437 = vst [vmem:[%s385 + $0xc8] sm:%s377] %v436
                %v438 = vld [vmem:[%s384 + $0x190] sm:%s377]
                %439 = vst [vmem:[%s385 + $0xd0] sm:%s377] %v438
                %v440 = vld [vmem:[%s384 + $0x198] sm:%s377]
                %441 = vst [vmem:[%s385 + $0xd8] sm:%s377] %v440
                %v442 = vld [vmem:[%s384 + $0x1a0] sm:%s377]
                %443 = vst [vmem:[%s385 + $0xe0] sm:%s377] %v442
                %v444 = vld [vmem:[%s384 + $0x1a8] sm:%s377]
                %445 = vst [vmem:[%s385 + $0xe8] sm:%s377] %v444
                %v446 = vld [vmem:[%s384 + $0x1b0] sm:%s377]
                %447 = vst [vmem:[%s385 + $0xf0] sm:%s377] %v446
                %v448 = vld [vmem:[%s384 + $0x1b8] sm:%s377]
                %449 = vst [vmem:[%s385 + $0xf8] sm:%s377] %v448
              $region69: #{tpu_custom_call.1} parent=63 // loop_footer
                %s383 = sadd.s32 1, %s379
              $region70: #{tpu_custom_call.1} parent=63 // loop_footer_branch
                %378 = sbr.rel target = $region66
              $region71: #{tpu_custom_call.1} parent=63 // loop_exit
                _
            $region64: #{tpu_custom_call.1} parent=55 // pred_fallthru
              _
          $region56: #{tpu_custom_call.1} parent=51 // pred_fallthru
            _
          %526 = vnop
        $region52: #{tpu_custom_call.1} parent=35 // pred_fallthru
          _
        // Predicated region
        $region87: #{tpu_custom_call.1} parent=35 // pred_check
          %p527 = pneg %p159
        $region88: #{tpu_custom_call.1} parent=35 // pred_check_branch
          %529 = sbr.rel (%p527) target = $region90
        $region89: #{tpu_custom_call.1} parent=35 // pred_region
          %p530 = scmp.lt.s32.totalorder %s27, 2
          %s531 = scalar_select %p530, %s27, 2
          %s532 = scalar_lea.vmem %s4, %s531
        $region90: #{tpu_custom_call.1} parent=35 // pred_fallthru
          _
      $region36: #{tpu_custom_call.1} parent=5 // pred_fallthru
        _
      %p533 = scmp.le.s32.totalorder 1, %s19
      %p534 = scmp.lt.s32.totalorder %s19, 7
      %p535 = pnand %p533, %p534
      %p536 = pneg %p535
      // Predicated region
      $region91: #{tpu_custom_call.1} parent=5 // pred_check
        _
      $region92: #{tpu_custom_call.1} parent=5 // pred_check_branch
        %538 = sbr.rel (%p535) target = $region94
      $region93: #{tpu_custom_call.1} parent=5 // pred_region
        %s539 = ssub.s32 %s19, 1
        %s540 = sand.u32 %s126, 1
        %s541 = sand.u32 %s126, 1
        %s542 = smul.addr %s541, 256
        %s543 = scalar_lea.vmem [#allocation3], %s542
        // Predicated region
        $region95: #{tpu_custom_call.1} parent=93 // pred_check
          %p544 = pneg %p139
        $region96: #{tpu_custom_call.1} parent=93 // pred_check_branch
          %546 = sbr.rel (%p544) target = $region98
        $region97: #{tpu_custom_call.1} parent=93 // pred_region
          _
        $region98: #{tpu_custom_call.1} parent=93 // pred_fallthru
          _
        %s547 = smul.u32 8, %s28
        %p548 = scmp.lt.s32.totalorder %s29, 2
        %s549 = scalar_select %p548, %s29, 2
        %p550 = scmp.lt.s32.totalorder %s547, 15
        %s551 = scalar_select %p550, %s547, 15
        %s552 = smul.addr %s549, 16
        %s553 = sadd.s32 %s551, %s552
        %s554 = smul.addr %s553, 4
        %s555 = scalar_lea.vmem %s0, %s554
        %p556 = pneg %p59
        %p557 = pneg %p56
        %p558 = scmp.lt.s32.totalorder %s29, 2
        %s559 = scalar_select %p558, %s29, 2
        %s560 = smul.addr %s559, 64
        %s561 = smul.addr %s560, 4
        %s562 = scalar_lea.vmem %s1, %s561
        %p563 = pneg %p85
        %p564 = pneg %p82
        %p565 = scmp.lt.s32.totalorder %s29, 2
        %s566 = scalar_select %p565, %s29, 2
        %s567 = smul.addr %s566, 4
        %s568 = scalar_lea.vmem %s2, %s567
        %p569 = pneg %p111
        %p570 = pneg %p108
        %s571 = sand.u32 %s126, 1
        %s572 = sand.u32 %s126, 1
        %s573 = smul.addr %s572, 256
        %s574 = scalar_lea.vmem [#allocation3], %s573
        %p575 = pneg %p139
        %p576 = pneg %p136
        %p577 = scmp.lt.s32.totalorder %s29, 2
        %s578 = scalar_select %p577, %s29, 2
        %s579 = scalar_lea.vmem %s4, %s578
        %p580 = pneg %p165
        %p581 = pneg %p162
        %p582 = pneg %p186
        %p583 = pneg %p183
        %p584 = pneg %p207
        %p585 = pneg %p204
        %p586 = pneg %p228
        %p587 = pneg %p225
        %p588 = pneg %p249
        %p589 = pneg %p246
        %p590 = pneg %p270
        %p591 = pneg %p267
        %p592 = pneg %p296
        %p593 = pneg %p293
        %s594 = sand.u32 %s283, 1
        %s595 = scalar_lea.sflag [#allocation5], %s594
        %s596 = sand.u32 %s283, 1
        %s597 = smul.addr %s596, 64
        %s598 = scalar_lea.vmem [#allocation4], %s597
        %s599 = smul.u32 8, %s28
        %p600 = scmp.lt.s32.totalorder %s29, 2
        %s601 = scalar_select %p600, %s29, 2
        %p602 = scmp.lt.s32.totalorder %s599, 15
        %s603 = scalar_select %p602, %s599, 15
        %s604 = smul.addr %s601, 16
        %s605 = sadd.s32 %s603, %s604
        %s606 = smul.addr %s605, 4
        %s607 = scalar_lea.vmem %s0, %s606
        %s608 = smul.u32 8, %s28
        %p609 = scmp.lt.s32.totalorder %s29, 2
        %s610 = scalar_select %p609, %s29, 2
        %s611 = smul.addr %s610, 64
        %s612 = smul.addr %s611, 4
        %s613 = scalar_lea.vmem %s1, %s612
        %p614 = scmp.lt.s32.totalorder %s29, 2
        %s615 = scalar_select %p614, %s29, 2
        %s616 = smul.addr %s615, 4
        %s617 = scalar_lea.vmem %s2, %s616
        %s618 = smul.u32 8, %s28
        %p619 = scmp.lt.s32.totalorder %s29, 2
        %s620 = scalar_select %p619, %s29, 2
        %s621 = scalar_lea.vmem %s4, %s620
        %s622 = smul.u32 8, %s28
        %v623 = vld [vmem:[%s607] sm:$0xf]
        %v624 = vld [vmem:[%s607 + $0x4] sm:$0xf]
        %v625 = vld [vmem:[%s607 + $0x8] sm:$0xf]
        %v626 = vld [vmem:[%s607 + $0xc] sm:$0xf]
        %v627 = vld [vmem:[%s607 + $0x10] sm:$0xf]
        %v628 = vld [vmem:[%s607 + $0x14] sm:$0xf]
        %v629 = vld [vmem:[%s607 + $0x18] sm:$0xf]
        %v630 = vld [vmem:[%s607 + $0x1c] sm:$0xf]
        %v631 = vunpack.c.l.bf16 %v623
        %v632 = vunpack.c.l.bf16 %v624
        %v633 = vunpack.c.l.bf16 %v625
        %v634 = vunpack.c.l.bf16 %v626
        %v635 = vunpack.c.l.bf16 %v627
        %v636 = vunpack.c.l.bf16 %v628
        %v637 = vunpack.c.l.bf16 %v629
        %v638 = vunpack.c.l.bf16 %v630
        %vm639 = vcmp.gt.f32.partialorder %v631, 0.0
        %vm640 = vcmp.gt.f32.partialorder %v632, 0.0
        %vm641 = vcmp.gt.f32.partialorder %v633, 0.0
        %vm642 = vcmp.gt.f32.partialorder %v634, 0.0
        %vm643 = vcmp.gt.f32.partialorder %v635, 0.0
        %vm644 = vcmp.gt.f32.partialorder %v636, 0.0
        %vm645 = vcmp.gt.f32.partialorder %v637, 0.0
        %vm646 = vcmp.gt.f32.partialorder %v638, 0.0
        %v647 = vsel %vm639, 0.0, -1e+30
        %v648 = vsel %vm640, 0.0, -1e+30
        %v649 = vsel %vm641, 0.0, -1e+30
        %v650 = vsel %vm642, 0.0, -1e+30
        %v651 = vsel %vm643, 0.0, -1e+30
        %v652 = vsel %vm644, 0.0, -1e+30
        %v653 = vsel %vm645, 0.0, -1e+30
        %v654 = vsel %vm646, 0.0, -1e+30
        %v655 = vld [vmem:[%s543] sm:$0xff]
        %v656 = vld [vmem:[%s543 + $0x8] sm:$0xff]
        %v657 = vld [vmem:[%s543 + $0x10] sm:$0xff]
        %v658 = vld [vmem:[%s543 + $0x18] sm:$0xff]
        %v659 = vld [vmem:[%s543 + $0x20] sm:$0xff]
        %v660 = vld [vmem:[%s543 + $0x28] sm:$0xff]
        %v661 = vld [vmem:[%s543 + $0x30] sm:$0xff]
        %v662 = vld [vmem:[%s543 + $0x38] sm:$0xff]
        %v663 = vld [vmem:[%s617] sm:$0x1]
        %665 = vset.pattern.permute.xlu0 0
        %666 = vperm.xlu0 %665, %v655
        %v667 = vpop.permute.xlu0 %666
        %670 = vset.pattern.permute.xlu0 0
        %671 = vperm.xlu0 %670, %v656
        %v672 = vpop.permute.xlu0 %671
        %675 = vset.pattern.permute.xlu0 0
        %676 = vperm.xlu0 %675, %v657
        %v677 = vpop.permute.xlu0 %676
        %680 = vset.pattern.permute.xlu0 0
        %681 = vperm.xlu0 %680, %v658
        %v682 = vpop.permute.xlu0 %681
        %685 = vset.pattern.permute.xlu0 0
        %686 = vperm.xlu0 %685, %v659
        %v687 = vpop.permute.xlu0 %686
        %690 = vset.pattern.permute.xlu0 0
        %691 = vperm.xlu0 %690, %v660
        %v692 = vpop.permute.xlu0 %691
        %695 = vset.pattern.permute.xlu0 0
        %696 = vperm.xlu0 %695, %v661
        %v697 = vpop.permute.xlu0 %696
        %700 = vset.pattern.permute.xlu0 0
        %701 = vperm.xlu0 %700, %v662
        %v702 = vpop.permute.xlu0 %701
        %v705 = vperm.slane %v663, 0
        %v707 = vadd.f32 %v667, %v705
        %v708 = vadd.f32 %v672, %v705
        %v709 = vadd.f32 %v677, %v705
        %v710 = vadd.f32 %v682, %v705
        %v711 = vadd.f32 %v687, %v705
        %v712 = vadd.f32 %v692, %v705
        %v713 = vadd.f32 %v697, %v705
        %v714 = vadd.f32 %v702, %v705
        %v715 = vmul.f32 %v707, 0.2
        %v716 = vmul.f32 %v708, 0.2
        %v717 = vmul.f32 %v709, 0.2
        %v718 = vmul.f32 %v710, 0.2
        %v719 = vmul.f32 %v711, 0.2
        %v720 = vmul.f32 %v712, 0.2
        %v721 = vmul.f32 %v713, 0.2
        %v722 = vmul.f32 %v714, 0.2
        %v723 = vmax.f32 %v707, %v715
        %v724 = vmax.f32 %v708, %v716
        %v725 = vmax.f32 %v709, %v717
        %v726 = vmax.f32 %v710, %v718
        %v727 = vmax.f32 %v711, %v719
        %v728 = vmax.f32 %v712, %v720
        %v729 = vmax.f32 %v713, %v721
        %v730 = vmax.f32 %v714, %v722
        %v731 = vadd.f32 %v723, %v647
        %v732 = vadd.f32 %v724, %v648
        %v733 = vadd.f32 %v725, %v649
        %v734 = vadd.f32 %v726, %v650
        %v735 = vadd.f32 %v727, %v651
        %v736 = vadd.f32 %v728, %v652
        %v737 = vadd.f32 %v729, %v653
        %v738 = vadd.f32 %v730, %v654
        %739 = vmax.xlane.f32.xlu0 %v731
        %v740 = vpop.xlane.xlu0 %739
        %741 = vmax.xlane.f32.xlu0 %v732
        %v742 = vpop.xlane.xlu0 %741
        %743 = vmax.xlane.f32.xlu0 %v733
        %v744 = vpop.xlane.xlu0 %743
        %745 = vmax.xlane.f32.xlu0 %v734
        %v746 = vpop.xlane.xlu0 %745
        %747 = vmax.xlane.f32.xlu0 %v735
        %v748 = vpop.xlane.xlu0 %747
        %749 = vmax.xlane.f32.xlu0 %v736
        %v750 = vpop.xlane.xlu0 %749
        %751 = vmax.xlane.f32.xlu0 %v737
        %v752 = vpop.xlane.xlu0 %751
        %753 = vmax.xlane.f32.xlu0 %v738
        %v754 = vpop.xlane.xlu0 %753
        %v755 = vsub.f32 %v731, %v740
        %v756 = vsub.f32 %v732, %v742
        %v757 = vsub.f32 %v733, %v744
        %v758 = vsub.f32 %v734, %v746
        %v759 = vsub.f32 %v735, %v748
        %v760 = vsub.f32 %v736, %v750
        %v761 = vsub.f32 %v737, %v752
        %v762 = vsub.f32 %v738, %v754
        %v763 = vmul.f32 %v755, 1.442695
        %v764 = vpow.pop %v763
        %v765 = vmul.f32 %v756, 1.442695
        %v766 = vpow.pop %v765
        %v767 = vmul.f32 %v757, 1.442695
        %v768 = vpow.pop %v767
        %v769 = vmul.f32 %v758, 1.442695
        %v770 = vpow.pop %v769
        %v771 = vmul.f32 %v759, 1.442695
        %v772 = vpow.pop %v771
        %v773 = vmul.f32 %v760, 1.442695
        %v774 = vpow.pop %v773
        %v775 = vmul.f32 %v761, 1.442695
        %v776 = vpow.pop %v775
        %v777 = vmul.f32 %v762, 1.442695
        %v778 = vpow.pop %v777
        %779 = vadd.xlane.f32.xlu0 %v764
        %v780 = vpop.xlane.xlu0 %779
        %781 = vadd.xlane.f32.xlu0 %v766
        %v782 = vpop.xlane.xlu0 %781
        %783 = vadd.xlane.f32.xlu0 %v768
        %v784 = vpop.xlane.xlu0 %783
        %785 = vadd.xlane.f32.xlu0 %v770
        %v786 = vpop.xlane.xlu0 %785
        %787 = vadd.xlane.f32.xlu0 %v772
        %v788 = vpop.xlane.xlu0 %787
        %789 = vadd.xlane.f32.xlu0 %v774
        %v790 = vpop.xlane.xlu0 %789
        %791 = vadd.xlane.f32.xlu0 %v776
        %v792 = vpop.xlane.xlu0 %791
        %793 = vadd.xlane.f32.xlu0 %v778
        %v794 = vpop.xlane.xlu0 %793
        %v795 = vrcp.pop %v780
        %v796 = vrcp.pop %v782
        %v797 = vrcp.pop %v784
        %v798 = vrcp.pop %v786
        %v799 = vrcp.pop %v788
        %v800 = vrcp.pop %v790
        %v801 = vrcp.pop %v792
        %v802 = vrcp.pop %v794
        %v803 = vmul.f32 %v764, %v795
        %v804 = vmul.f32 %v766, %v796
        %v805 = vmul.f32 %v768, %v797
        %v806 = vmul.f32 %v770, %v798
        %v807 = vmul.f32 %v772, %v799
        %v808 = vmul.f32 %v774, %v800
        %v809 = vmul.f32 %v776, %v801
        %v810 = vmul.f32 %v778, %v802
        %v811 = vpack.c.bf16 %v804, %v803
        %v812 = vpack.c.bf16 %v806, %v805
        %v813 = vpack.c.bf16 %v808, %v807
        %v814 = vpack.c.bf16 %v810, %v809
        %v815 = vld [vmem:[%s613] sm:$0xf]
        %v816 = vld [vmem:[%s613 + $0x4] sm:$0xf]
        %v817 = vld [vmem:[%s613 + $0x8] sm:$0xf]
        %v818 = vld [vmem:[%s613 + $0xc] sm:$0xf]
        %v819 = vld [vmem:[%s613 + $0x10] sm:$0xf]
        %v820 = vld [vmem:[%s613 + $0x14] sm:$0xf]
        %v821 = vld [vmem:[%s613 + $0x18] sm:$0xf]
        %v822 = vld [vmem:[%s613 + $0x1c] sm:$0xf]
        %v823 = vld [vmem:[%s613 + $0x20] sm:$0xf]
        %v824 = vld [vmem:[%s613 + $0x24] sm:$0xf]
        %v825 = vld [vmem:[%s613 + $0x28] sm:$0xf]
        %v826 = vld [vmem:[%s613 + $0x2c] sm:$0xf]
        %v827 = vld [vmem:[%s613 + $0x30] sm:$0xf]
        %v828 = vld [vmem:[%s613 + $0x34] sm:$0xf]
        %v829 = vld [vmem:[%s613 + $0x38] sm:$0xf]
        %v830 = vld [vmem:[%s613 + $0x3c] sm:$0xf]
        %v847 = vunpack.c.l.b16 %v815
        %v848 = vunpack.c.l.b16 %v816
        %v849 = vunpack.c.l.b16 %v817
        %v850 = vunpack.c.l.b16 %v818
        %v851 = vunpack.c.l.b16 %v819
        %v852 = vunpack.c.l.b16 %v820
        %v853 = vunpack.c.l.b16 %v821
        %v854 = vunpack.c.l.b16 %v822
        %v855 = vunpack.c.l.b16 %v823
        %v856 = vunpack.c.l.b16 %v824
        %v857 = vunpack.c.l.b16 %v825
        %v858 = vunpack.c.l.b16 %v826
        %v859 = vunpack.c.l.b16 %v827
        %v860 = vunpack.c.l.b16 %v828
        %v861 = vunpack.c.l.b16 %v829
        %v862 = vunpack.c.l.b16 %v830
        %v863 = vpack.c.b16 %v848, %v847
        %v864 = vpack.c.b16 %v850, %v849
        %v865 = vpack.c.b16 %v852, %v851
        %v866 = vpack.c.b16 %v854, %v853
        %v867 = vpack.c.b16 %v856, %v855
        %v868 = vpack.c.b16 %v858, %v857
        %v869 = vpack.c.b16 %v860, %v859
        %v870 = vpack.c.b16 %v862, %v861
        %879 = vmatpush.bf16.msra.mxu0 %v870
        %880 = vmatpush.bf16.msra.mxu0 %v869
        %881 = vmatpush.bf16.msra.mxu0 %v868
        %882 = vmatpush.bf16.msra.mxu0 %v867
        %883 = vmatpush.bf16.msra.mxu0 %v866
        %884 = vmatpush.bf16.msra.mxu0 %v865
        %885 = vmatpush.bf16.msra.mxu0 %v864
        %886 = vmatpush.bf16.msra.mxu0 %v863
        %887 = vmatmul.bf16.gmra.mxu0 %v811
        %v888 = vpop.f32.mrf.mxu0
        %v889 = vadd.f32 0.0, %v888
        %v890 = vpop.f32.mrf.mxu0
        %v891 = vadd.f32 0.0, %v890
        %892 = vmatmul.bf16.gmra.mxu0 %v812
        %v893 = vpop.f32.mrf.mxu0
        %v894 = vadd.f32 0.0, %v893
        %v895 = vpop.f32.mrf.mxu0
        %v896 = vadd.f32 0.0, %v895
        %897 = vmatmul.bf16.gmra.mxu0 %v813
        %v898 = vpop.f32.mrf.mxu0
        %v899 = vadd.f32 0.0, %v898
        %v900 = vpop.f32.mrf.mxu0
        %v901 = vadd.f32 0.0, %v900
        %902 = vmatmul.bf16.gmra.mxu0 %v814
        %v903 = vpop.f32.mrf.mxu0
        %v904 = vadd.f32 0.0, %v903
        %v905 = vpop.f32.mrf.mxu0
        %v906 = vadd.f32 0.0, %v905
        %907 = vdwg.mxu0
        %s908 = scalar_lea.vmem %s543, 64 [#allocation3]
        %v909 = vld [vmem:[%s908] sm:$0xff]
        %v910 = vld [vmem:[%s908 + $0x8] sm:$0xff]
        %v911 = vld [vmem:[%s908 + $0x10] sm:$0xff]
        %v912 = vld [vmem:[%s908 + $0x18] sm:$0xff]
        %v913 = vld [vmem:[%s908 + $0x20] sm:$0xff]
        %v914 = vld [vmem:[%s908 + $0x28] sm:$0xff]
        %v915 = vld [vmem:[%s908 + $0x30] sm:$0xff]
        %v916 = vld [vmem:[%s908 + $0x38] sm:$0xff]
        %s917 = scalar_lea.vmem %s617, 1
        %v918 = vld [vmem:[%s917] sm:$0x1]
        %920 = vset.pattern.permute.xlu0 0
        %921 = vperm.xlu0 %920, %v909
        %v922 = vpop.permute.xlu0 %921
        %925 = vset.pattern.permute.xlu0 0
        %926 = vperm.xlu0 %925, %v910
        %v927 = vpop.permute.xlu0 %926
        %930 = vset.pattern.permute.xlu0 0
        %931 = vperm.xlu0 %930, %v911
        %v932 = vpop.permute.xlu0 %931
        %935 = vset.pattern.permute.xlu0 0
        %936 = vperm.xlu0 %935, %v912
        %v937 = vpop.permute.xlu0 %936
        %940 = vset.pattern.permute.xlu0 0
        %941 = vperm.xlu0 %940, %v913
        %v942 = vpop.permute.xlu0 %941
        %945 = vset.pattern.permute.xlu0 0
        %946 = vperm.xlu0 %945, %v914
        %v947 = vpop.permute.xlu0 %946
        %950 = vset.pattern.permute.xlu0 0
        %951 = vperm.xlu0 %950, %v915
        %v952 = vpop.permute.xlu0 %951
        %955 = vset.pattern.permute.xlu0 0
        %956 = vperm.xlu0 %955, %v916
        %v957 = vpop.permute.xlu0 %956
        %v960 = vperm.slane %v918, 0
        %v962 = vadd.f32 %v922, %v960
        %v963 = vadd.f32 %v927, %v960
        %v964 = vadd.f32 %v932, %v960
        %v965 = vadd.f32 %v937, %v960
        %v966 = vadd.f32 %v942, %v960
        %v967 = vadd.f32 %v947, %v960
        %v968 = vadd.f32 %v952, %v960
        %v969 = vadd.f32 %v957, %v960
        %v970 = vmul.f32 %v962, 0.2
        %v971 = vmul.f32 %v963, 0.2
        %v972 = vmul.f32 %v964, 0.2
        %v973 = vmul.f32 %v965, 0.2
        %v974 = vmul.f32 %v966, 0.2
        %v975 = vmul.f32 %v967, 0.2
        %v976 = vmul.f32 %v968, 0.2
        %v977 = vmul.f32 %v969, 0.2
        %v978 = vmax.f32 %v962, %v970
        %v979 = vmax.f32 %v963, %v971
        %v980 = vmax.f32 %v964, %v972
        %v981 = vmax.f32 %v965, %v973
        %v982 = vmax.f32 %v966, %v974
        %v983 = vmax.f32 %v967, %v975
        %v984 = vmax.f32 %v968, %v976
        %v985 = vmax.f32 %v969, %v977
        %v986 = vadd.f32 %v978, %v647
        %v987 = vadd.f32 %v979, %v648
        %v988 = vadd.f32 %v980, %v649
        %v989 = vadd.f32 %v981, %v650
        %v990 = vadd.f32 %v982, %v651
        %v991 = vadd.f32 %v983, %v652
        %v992 = vadd.f32 %v984, %v653
        %v993 = vadd.f32 %v985, %v654
        %994 = vmax.xlane.f32.xlu0 %v986
        %v995 = vpop.xlane.xlu0 %994
        %996 = vmax.xlane.f32.xlu0 %v987
        %v997 = vpop.xlane.xlu0 %996
        %998 = vmax.xlane.f32.xlu0 %v988
        %v999 = vpop.xlane.xlu0 %998
        %1000 = vmax.xlane.f32.xlu0 %v989
        %v1001 = vpop.xlane.xlu0 %1000
        %1002 = vmax.xlane.f32.xlu0 %v990
        %v1003 = vpop.xlane.xlu0 %1002
        %1004 = vmax.xlane.f32.xlu0 %v991
        %v1005 = vpop.xlane.xlu0 %1004
        %1006 = vmax.xlane.f32.xlu0 %v992
        %v1007 = vpop.xlane.xlu0 %1006
        %1008 = vmax.xlane.f32.xlu0 %v993
        %v1009 = vpop.xlane.xlu0 %1008
        %v1010 = vsub.f32 %v986, %v995
        %v1011 = vsub.f32 %v987, %v997
        %v1012 = vsub.f32 %v988, %v999
        %v1013 = vsub.f32 %v989, %v1001
        %v1014 = vsub.f32 %v990, %v1003
        %v1015 = vsub.f32 %v991, %v1005
        %v1016 = vsub.f32 %v992, %v1007
        %v1017 = vsub.f32 %v993, %v1009
        %v1018 = vmul.f32 %v1010, 1.442695
        %v1019 = vpow.pop %v1018
        %v1020 = vmul.f32 %v1011, 1.442695
        %v1021 = vpow.pop %v1020
        %v1022 = vmul.f32 %v1012, 1.442695
        %v1023 = vpow.pop %v1022
        %v1024 = vmul.f32 %v1013, 1.442695
        %v1025 = vpow.pop %v1024
        %v1026 = vmul.f32 %v1014, 1.442695
        %v1027 = vpow.pop %v1026
        %v1028 = vmul.f32 %v1015, 1.442695
        %v1029 = vpow.pop %v1028
        %v1030 = vmul.f32 %v1016, 1.442695
        %v1031 = vpow.pop %v1030
        %v1032 = vmul.f32 %v1017, 1.442695
        %v1033 = vpow.pop %v1032
        %1034 = vadd.xlane.f32.xlu0 %v1019
        %v1035 = vpop.xlane.xlu0 %1034
        %1036 = vadd.xlane.f32.xlu0 %v1021
        %v1037 = vpop.xlane.xlu0 %1036
        %1038 = vadd.xlane.f32.xlu0 %v1023
        %v1039 = vpop.xlane.xlu0 %1038
        %1040 = vadd.xlane.f32.xlu0 %v1025
        %v1041 = vpop.xlane.xlu0 %1040
        %1042 = vadd.xlane.f32.xlu0 %v1027
        %v1043 = vpop.xlane.xlu0 %1042
        %1044 = vadd.xlane.f32.xlu0 %v1029
        %v1045 = vpop.xlane.xlu0 %1044
        %1046 = vadd.xlane.f32.xlu0 %v1031
        %v1047 = vpop.xlane.xlu0 %1046
        %1048 = vadd.xlane.f32.xlu0 %v1033
        %v1049 = vpop.xlane.xlu0 %1048
        %v1050 = vrcp.pop %v1035
        %v1051 = vrcp.pop %v1037
        %v1052 = vrcp.pop %v1039
        %v1053 = vrcp.pop %v1041
        %v1054 = vrcp.pop %v1043
        %v1055 = vrcp.pop %v1045
        %v1056 = vrcp.pop %v1047
        %v1057 = vrcp.pop %v1049
        %v1058 = vmul.f32 %v1019, %v1050
        %v1059 = vmul.f32 %v1021, %v1051
        %v1060 = vmul.f32 %v1023, %v1052
        %v1061 = vmul.f32 %v1025, %v1053
        %v1062 = vmul.f32 %v1027, %v1054
        %v1063 = vmul.f32 %v1029, %v1055
        %v1064 = vmul.f32 %v1031, %v1056
        %v1065 = vmul.f32 %v1033, %v1057
        %v1066 = vpack.c.bf16 %v1059, %v1058
        %v1067 = vpack.c.bf16 %v1061, %v1060
        %v1068 = vpack.c.bf16 %v1063, %v1062
        %v1069 = vpack.c.bf16 %v1065, %v1064
        %s1070 = scalar_lea.vmem %s613, 64
        %v1071 = vld [vmem:[%s1070] sm:$0xf]
        %v1072 = vld [vmem:[%s1070 + $0x4] sm:$0xf]
        %v1073 = vld [vmem:[%s1070 + $0x8] sm:$0xf]
        %v1074 = vld [vmem:[%s1070 + $0xc] sm:$0xf]
        %v1075 = vld [vmem:[%s1070 + $0x10] sm:$0xf]
        %v1076 = vld [vmem:[%s1070 + $0x14] sm:$0xf]
        %v1077 = vld [vmem:[%s1070 + $0x18] sm:$0xf]
        %v1078 = vld [vmem:[%s1070 + $0x1c] sm:$0xf]
        %v1079 = vld [vmem:[%s1070 + $0x20] sm:$0xf]
        %v1080 = vld [vmem:[%s1070 + $0x24] sm:$0xf]
        %v1081 = vld [vmem:[%s1070 + $0x28] sm:$0xf]
        %v1082 = vld [vmem:[%s1070 + $0x2c] sm:$0xf]
        %v1083 = vld [vmem:[%s1070 + $0x30] sm:$0xf]
        %v1084 = vld [vmem:[%s1070 + $0x34] sm:$0xf]
        %v1085 = vld [vmem:[%s1070 + $0x38] sm:$0xf]
        %v1086 = vld [vmem:[%s1070 + $0x3c] sm:$0xf]
        %v1103 = vunpack.c.l.b16 %v1071
        %v1104 = vunpack.c.l.b16 %v1072
        %v1105 = vunpack.c.l.b16 %v1073
        %v1106 = vunpack.c.l.b16 %v1074
        %v1107 = vunpack.c.l.b16 %v1075
        %v1108 = vunpack.c.l.b16 %v1076
        %v1109 = vunpack.c.l.b16 %v1077
        %v1110 = vunpack.c.l.b16 %v1078
        %v1111 = vunpack.c.l.b16 %v1079
        %v1112 = vunpack.c.l.b16 %v1080
        %v1113 = vunpack.c.l.b16 %v1081
        %v1114 = vunpack.c.l.b16 %v1082
        %v1115 = vunpack.c.l.b16 %v1083
        %v1116 = vunpack.c.l.b16 %v1084
        %v1117 = vunpack.c.l.b16 %v1085
        %v1118 = vunpack.c.l.b16 %v1086
        %v1119 = vpack.c.b16 %v1104, %v1103
        %v1120 = vpack.c.b16 %v1106, %v1105
        %v1121 = vpack.c.b16 %v1108, %v1107
        %v1122 = vpack.c.b16 %v1110, %v1109
        %v1123 = vpack.c.b16 %v1112, %v1111
        %v1124 = vpack.c.b16 %v1114, %v1113
        %v1125 = vpack.c.b16 %v1116, %v1115
        %v1126 = vpack.c.b16 %v1118, %v1117
        %1135 = vmatpush.bf16.msra.mxu0 %v1126
        %1136 = vmatpush.bf16.msra.mxu0 %v1125
        %1137 = vmatpush.bf16.msra.mxu0 %v1124
        %1138 = vmatpush.bf16.msra.mxu0 %v1123
        %1139 = vmatpush.bf16.msra.mxu0 %v1122
        %1140 = vmatpush.bf16.msra.mxu0 %v1121
        %1141 = vmatpush.bf16.msra.mxu0 %v1120
        %1142 = vmatpush.bf16.msra.mxu0 %v1119
        %1143 = vmatmul.bf16.gmra.mxu0 %v1066
        %v1144 = vpop.f32.mrf.mxu0
        %v1145 = vadd.f32 0.0, %v1144
        %v1146 = vpop.f32.mrf.mxu0
        %v1147 = vadd.f32 0.0, %v1146
        %1148 = vmatmul.bf16.gmra.mxu0 %v1067
        %v1149 = vpop.f32.mrf.mxu0
        %v1150 = vadd.f32 0.0, %v1149
        %v1151 = vpop.f32.mrf.mxu0
        %v1152 = vadd.f32 0.0, %v1151
        %1153 = vmatmul.bf16.gmra.mxu0 %v1068
        %v1154 = vpop.f32.mrf.mxu0
        %v1155 = vadd.f32 0.0, %v1154
        %v1156 = vpop.f32.mrf.mxu0
        %v1157 = vadd.f32 0.0, %v1156
        %1158 = vmatmul.bf16.gmra.mxu0 %v1069
        %v1159 = vpop.f32.mrf.mxu0
        %v1160 = vadd.f32 0.0, %v1159
        %v1161 = vpop.f32.mrf.mxu0
        %v1162 = vadd.f32 0.0, %v1161
        %1163 = vdwg.mxu0
        %s1164 = scalar_lea.vmem %s543, 128 [#allocation3]
        %v1165 = vld [vmem:[%s1164] sm:$0xff]
        %v1166 = vld [vmem:[%s1164 + $0x8] sm:$0xff]
        %v1167 = vld [vmem:[%s1164 + $0x10] sm:$0xff]
        %v1168 = vld [vmem:[%s1164 + $0x18] sm:$0xff]
        %v1169 = vld [vmem:[%s1164 + $0x20] sm:$0xff]
        %v1170 = vld [vmem:[%s1164 + $0x28] sm:$0xff]
        %v1171 = vld [vmem:[%s1164 + $0x30] sm:$0xff]
        %v1172 = vld [vmem:[%s1164 + $0x38] sm:$0xff]
        %s1173 = scalar_lea.vmem %s617, 2
        %v1174 = vld [vmem:[%s1173] sm:$0x1]
        %1176 = vset.pattern.permute.xlu0 0
        %1177 = vperm.xlu0 %1176, %v1165
        %v1178 = vpop.permute.xlu0 %1177
        %1181 = vset.pattern.permute.xlu0 0
        %1182 = vperm.xlu0 %1181, %v1166
        %v1183 = vpop.permute.xlu0 %1182
        %1186 = vset.pattern.permute.xlu0 0
        %1187 = vperm.xlu0 %1186, %v1167
        %v1188 = vpop.permute.xlu0 %1187
        %1191 = vset.pattern.permute.xlu0 0
        %1192 = vperm.xlu0 %1191, %v1168
        %v1193 = vpop.permute.xlu0 %1192
        %1196 = vset.pattern.permute.xlu0 0
        %1197 = vperm.xlu0 %1196, %v1169
        %v1198 = vpop.permute.xlu0 %1197
        %1201 = vset.pattern.permute.xlu0 0
        %1202 = vperm.xlu0 %1201, %v1170
        %v1203 = vpop.permute.xlu0 %1202
        %1206 = vset.pattern.permute.xlu0 0
        %1207 = vperm.xlu0 %1206, %v1171
        %v1208 = vpop.permute.xlu0 %1207
        %1211 = vset.pattern.permute.xlu0 0
        %1212 = vperm.xlu0 %1211, %v1172
        %v1213 = vpop.permute.xlu0 %1212
        %v1216 = vperm.slane %v1174, 0
        %v1218 = vadd.f32 %v1178, %v1216
        %v1219 = vadd.f32 %v1183, %v1216
        %v1220 = vadd.f32 %v1188, %v1216
        %v1221 = vadd.f32 %v1193, %v1216
        %v1222 = vadd.f32 %v1198, %v1216
        %v1223 = vadd.f32 %v1203, %v1216
        %v1224 = vadd.f32 %v1208, %v1216
        %v1225 = vadd.f32 %v1213, %v1216
        %v1226 = vmul.f32 %v1218, 0.2
        %v1227 = vmul.f32 %v1219, 0.2
        %v1228 = vmul.f32 %v1220, 0.2
        %v1229 = vmul.f32 %v1221, 0.2
        %v1230 = vmul.f32 %v1222, 0.2
        %v1231 = vmul.f32 %v1223, 0.2
        %v1232 = vmul.f32 %v1224, 0.2
        %v1233 = vmul.f32 %v1225, 0.2
        %v1234 = vmax.f32 %v1218, %v1226
        %v1235 = vmax.f32 %v1219, %v1227
        %v1236 = vmax.f32 %v1220, %v1228
        %v1237 = vmax.f32 %v1221, %v1229
        %v1238 = vmax.f32 %v1222, %v1230
        %v1239 = vmax.f32 %v1223, %v1231
        %v1240 = vmax.f32 %v1224, %v1232
        %v1241 = vmax.f32 %v1225, %v1233
        %v1242 = vadd.f32 %v1234, %v647
        %v1243 = vadd.f32 %v1235, %v648
        %v1244 = vadd.f32 %v1236, %v649
        %v1245 = vadd.f32 %v1237, %v650
        %v1246 = vadd.f32 %v1238, %v651
        %v1247 = vadd.f32 %v1239, %v652
        %v1248 = vadd.f32 %v1240, %v653
        %v1249 = vadd.f32 %v1241, %v654
        %1250 = vmax.xlane.f32.xlu0 %v1242
        %v1251 = vpop.xlane.xlu0 %1250
        %1252 = vmax.xlane.f32.xlu0 %v1243
        %v1253 = vpop.xlane.xlu0 %1252
        %1254 = vmax.xlane.f32.xlu0 %v1244
        %v1255 = vpop.xlane.xlu0 %1254
        %1256 = vmax.xlane.f32.xlu0 %v1245
        %v1257 = vpop.xlane.xlu0 %1256
        %1258 = vmax.xlane.f32.xlu0 %v1246
        %v1259 = vpop.xlane.xlu0 %1258
        %1260 = vmax.xlane.f32.xlu0 %v1247
        %v1261 = vpop.xlane.xlu0 %1260
        %1262 = vmax.xlane.f32.xlu0 %v1248
        %v1263 = vpop.xlane.xlu0 %1262
        %1264 = vmax.xlane.f32.xlu0 %v1249
        %v1265 = vpop.xlane.xlu0 %1264
        %v1266 = vsub.f32 %v1242, %v1251
        %v1267 = vsub.f32 %v1243, %v1253
        %v1268 = vsub.f32 %v1244, %v1255
        %v1269 = vsub.f32 %v1245, %v1257
        %v1270 = vsub.f32 %v1246, %v1259
        %v1271 = vsub.f32 %v1247, %v1261
        %v1272 = vsub.f32 %v1248, %v1263
        %v1273 = vsub.f32 %v1249, %v1265
        %v1274 = vmul.f32 %v1266, 1.442695
        %v1275 = vpow.pop %v1274
        %v1276 = vmul.f32 %v1267, 1.442695
        %v1277 = vpow.pop %v1276
        %v1278 = vmul.f32 %v1268, 1.442695
        %v1279 = vpow.pop %v1278
        %v1280 = vmul.f32 %v1269, 1.442695
        %v1281 = vpow.pop %v1280
        %v1282 = vmul.f32 %v1270, 1.442695
        %v1283 = vpow.pop %v1282
        %v1284 = vmul.f32 %v1271, 1.442695
        %v1285 = vpow.pop %v1284
        %v1286 = vmul.f32 %v1272, 1.442695
        %v1287 = vpow.pop %v1286
        %v1288 = vmul.f32 %v1273, 1.442695
        %v1289 = vpow.pop %v1288
        %1290 = vadd.xlane.f32.xlu0 %v1275
        %v1291 = vpop.xlane.xlu0 %1290
        %1292 = vadd.xlane.f32.xlu0 %v1277
        %v1293 = vpop.xlane.xlu0 %1292
        %1294 = vadd.xlane.f32.xlu0 %v1279
        %v1295 = vpop.xlane.xlu0 %1294
        %1296 = vadd.xlane.f32.xlu0 %v1281
        %v1297 = vpop.xlane.xlu0 %1296
        %1298 = vadd.xlane.f32.xlu0 %v1283
        %v1299 = vpop.xlane.xlu0 %1298
        %1300 = vadd.xlane.f32.xlu0 %v1285
        %v1301 = vpop.xlane.xlu0 %1300
        %1302 = vadd.xlane.f32.xlu0 %v1287
        %v1303 = vpop.xlane.xlu0 %1302
        %1304 = vadd.xlane.f32.xlu0 %v1289
        %v1305 = vpop.xlane.xlu0 %1304
        %v1306 = vrcp.pop %v1291
        %v1307 = vrcp.pop %v1293
        %v1308 = vrcp.pop %v1295
        %v1309 = vrcp.pop %v1297
        %v1310 = vrcp.pop %v1299
        %v1311 = vrcp.pop %v1301
        %v1312 = vrcp.pop %v1303
        %v1313 = vrcp.pop %v1305
        %v1314 = vmul.f32 %v1275, %v1306
        %v1315 = vmul.f32 %v1277, %v1307
        %v1316 = vmul.f32 %v1279, %v1308
        %v1317 = vmul.f32 %v1281, %v1309
        %v1318 = vmul.f32 %v1283, %v1310
        %v1319 = vmul.f32 %v1285, %v1311
        %v1320 = vmul.f32 %v1287, %v1312
        %v1321 = vmul.f32 %v1289, %v1313
        %v1322 = vpack.c.bf16 %v1315, %v1314
        %v1323 = vpack.c.bf16 %v1317, %v1316
        %v1324 = vpack.c.bf16 %v1319, %v1318
        %v1325 = vpack.c.bf16 %v1321, %v1320
        %s1326 = scalar_lea.vmem %s613, 128
        %v1327 = vld [vmem:[%s1326] sm:$0xf]
        %v1328 = vld [vmem:[%s1326 + $0x4] sm:$0xf]
        %v1329 = vld [vmem:[%s1326 + $0x8] sm:$0xf]
        %v1330 = vld [vmem:[%s1326 + $0xc] sm:$0xf]
        %v1331 = vld [vmem:[%s1326 + $0x10] sm:$0xf]
        %v1332 = vld [vmem:[%s1326 + $0x14] sm:$0xf]
        %v1333 = vld [vmem:[%s1326 + $0x18] sm:$0xf]
        %v1334 = vld [vmem:[%s1326 + $0x1c] sm:$0xf]
        %v1335 = vld [vmem:[%s1326 + $0x20] sm:$0xf]
        %v1336 = vld [vmem:[%s1326 + $0x24] sm:$0xf]
        %v1337 = vld [vmem:[%s1326 + $0x28] sm:$0xf]
        %v1338 = vld [vmem:[%s1326 + $0x2c] sm:$0xf]
        %v1339 = vld [vmem:[%s1326 + $0x30] sm:$0xf]
        %v1340 = vld [vmem:[%s1326 + $0x34] sm:$0xf]
        %v1341 = vld [vmem:[%s1326 + $0x38] sm:$0xf]
        %v1342 = vld [vmem:[%s1326 + $0x3c] sm:$0xf]
        %v1359 = vunpack.c.l.b16 %v1327
        %v1360 = vunpack.c.l.b16 %v1328
        %v1361 = vunpack.c.l.b16 %v1329
        %v1362 = vunpack.c.l.b16 %v1330
        %v1363 = vunpack.c.l.b16 %v1331
        %v1364 = vunpack.c.l.b16 %v1332
        %v1365 = vunpack.c.l.b16 %v1333
        %v1366 = vunpack.c.l.b16 %v1334
        %v1367 = vunpack.c.l.b16 %v1335
        %v1368 = vunpack.c.l.b16 %v1336
        %v1369 = vunpack.c.l.b16 %v1337
        %v1370 = vunpack.c.l.b16 %v1338
        %v1371 = vunpack.c.l.b16 %v1339
        %v1372 = vunpack.c.l.b16 %v1340
        %v1373 = vunpack.c.l.b16 %v1341
        %v1374 = vunpack.c.l.b16 %v1342
        %v1375 = vpack.c.b16 %v1360, %v1359
        %v1376 = vpack.c.b16 %v1362, %v1361
        %v1377 = vpack.c.b16 %v1364, %v1363
        %v1378 = vpack.c.b16 %v1366, %v1365
        %v1379 = vpack.c.b16 %v1368, %v1367
        %v1380 = vpack.c.b16 %v1370, %v1369
        %v1381 = vpack.c.b16 %v1372, %v1371
        %v1382 = vpack.c.b16 %v1374, %v1373
        %1391 = vmatpush.bf16.msra.mxu0 %v1382
        %1392 = vmatpush.bf16.msra.mxu0 %v1381
        %1393 = vmatpush.bf16.msra.mxu0 %v1380
        %1394 = vmatpush.bf16.msra.mxu0 %v1379
        %1395 = vmatpush.bf16.msra.mxu0 %v1378
        %1396 = vmatpush.bf16.msra.mxu0 %v1377
        %1397 = vmatpush.bf16.msra.mxu0 %v1376
        %1398 = vmatpush.bf16.msra.mxu0 %v1375
        %1399 = vmatmul.bf16.gmra.mxu0 %v1322
        %v1400 = vpop.f32.mrf.mxu0
        %v1401 = vadd.f32 0.0, %v1400
        %v1402 = vpop.f32.mrf.mxu0
        %v1403 = vadd.f32 0.0, %v1402
        %1404 = vmatmul.bf16.gmra.mxu0 %v1323
        %v1405 = vpop.f32.mrf.mxu0
        %v1406 = vadd.f32 0.0, %v1405
        %v1407 = vpop.f32.mrf.mxu0
        %v1408 = vadd.f32 0.0, %v1407
        %1409 = vmatmul.bf16.gmra.mxu0 %v1324
        %v1410 = vpop.f32.mrf.mxu0
        %v1411 = vadd.f32 0.0, %v1410
        %v1412 = vpop.f32.mrf.mxu0
        %v1413 = vadd.f32 0.0, %v1412
        %1414 = vmatmul.bf16.gmra.mxu0 %v1325
        %v1415 = vpop.f32.mrf.mxu0
        %v1416 = vadd.f32 0.0, %v1415
        %v1417 = vpop.f32.mrf.mxu0
        %v1418 = vadd.f32 0.0, %v1417
        %1419 = vdwg.mxu0
        %s1420 = scalar_lea.vmem %s543, 192 [#allocation3]
        %v1421 = vld [vmem:[%s1420] sm:$0xff]
        %v1422 = vld [vmem:[%s1420 + $0x8] sm:$0xff]
        %v1423 = vld [vmem:[%s1420 + $0x10] sm:$0xff]
        %v1424 = vld [vmem:[%s1420 + $0x18] sm:$0xff]
        %v1425 = vld [vmem:[%s1420 + $0x20] sm:$0xff]
        %v1426 = vld [vmem:[%s1420 + $0x28] sm:$0xff]
        %v1427 = vld [vmem:[%s1420 + $0x30] sm:$0xff]
        %v1428 = vld [vmem:[%s1420 + $0x38] sm:$0xff]
        %s1429 = scalar_lea.vmem %s617, 3
        %v1430 = vld [vmem:[%s1429] sm:$0x1]
        %1432 = vset.pattern.permute.xlu0 0
        %1433 = vperm.xlu0 %1432, %v1421
        %v1434 = vpop.permute.xlu0 %1433
        %1437 = vset.pattern.permute.xlu0 0
        %1438 = vperm.xlu0 %1437, %v1422
        %v1439 = vpop.permute.xlu0 %1438
        %1442 = vset.pattern.permute.xlu0 0
        %1443 = vperm.xlu0 %1442, %v1423
        %v1444 = vpop.permute.xlu0 %1443
        %1447 = vset.pattern.permute.xlu0 0
        %1448 = vperm.xlu0 %1447, %v1424
        %v1449 = vpop.permute.xlu0 %1448
        %1452 = vset.pattern.permute.xlu0 0
        %1453 = vperm.xlu0 %1452, %v1425
        %v1454 = vpop.permute.xlu0 %1453
        %1457 = vset.pattern.permute.xlu0 0
        %1458 = vperm.xlu0 %1457, %v1426
        %v1459 = vpop.permute.xlu0 %1458
        %1462 = vset.pattern.permute.xlu0 0
        %1463 = vperm.xlu0 %1462, %v1427
        %v1464 = vpop.permute.xlu0 %1463
        %1467 = vset.pattern.permute.xlu0 0
        %1468 = vperm.xlu0 %1467, %v1428
        %v1469 = vpop.permute.xlu0 %1468
        %v1472 = vperm.slane %v1430, 0
        %v1474 = vadd.f32 %v1434, %v1472
        %v1475 = vadd.f32 %v1439, %v1472
        %v1476 = vadd.f32 %v1444, %v1472
        %v1477 = vadd.f32 %v1449, %v1472
        %v1478 = vadd.f32 %v1454, %v1472
        %v1479 = vadd.f32 %v1459, %v1472
        %v1480 = vadd.f32 %v1464, %v1472
        %v1481 = vadd.f32 %v1469, %v1472
        %v1482 = vmul.f32 %v1474, 0.2
        %v1483 = vmul.f32 %v1475, 0.2
        %v1484 = vmul.f32 %v1476, 0.2
        %v1485 = vmul.f32 %v1477, 0.2
        %v1486 = vmul.f32 %v1478, 0.2
        %v1487 = vmul.f32 %v1479, 0.2
        %v1488 = vmul.f32 %v1480, 0.2
        %v1489 = vmul.f32 %v1481, 0.2
        %v1490 = vmax.f32 %v1474, %v1482
        %v1491 = vmax.f32 %v1475, %v1483
        %v1492 = vmax.f32 %v1476, %v1484
        %v1493 = vmax.f32 %v1477, %v1485
        %v1494 = vmax.f32 %v1478, %v1486
        %v1495 = vmax.f32 %v1479, %v1487
        %v1496 = vmax.f32 %v1480, %v1488
        %v1497 = vmax.f32 %v1481, %v1489
        %v1498 = vadd.f32 %v1490, %v647
        %v1499 = vadd.f32 %v1491, %v648
        %v1500 = vadd.f32 %v1492, %v649
        %v1501 = vadd.f32 %v1493, %v650
        %v1502 = vadd.f32 %v1494, %v651
        %v1503 = vadd.f32 %v1495, %v652
        %v1504 = vadd.f32 %v1496, %v653
        %v1505 = vadd.f32 %v1497, %v654
        %1506 = vmax.xlane.f32.xlu0 %v1498
        %v1507 = vpop.xlane.xlu0 %1506
        %1508 = vmax.xlane.f32.xlu0 %v1499
        %v1509 = vpop.xlane.xlu0 %1508
        %1510 = vmax.xlane.f32.xlu0 %v1500
        %v1511 = vpop.xlane.xlu0 %1510
        %1512 = vmax.xlane.f32.xlu0 %v1501
        %v1513 = vpop.xlane.xlu0 %1512
        %1514 = vmax.xlane.f32.xlu0 %v1502
        %v1515 = vpop.xlane.xlu0 %1514
        %1516 = vmax.xlane.f32.xlu0 %v1503
        %v1517 = vpop.xlane.xlu0 %1516
        %1518 = vmax.xlane.f32.xlu0 %v1504
        %v1519 = vpop.xlane.xlu0 %1518
        %1520 = vmax.xlane.f32.xlu0 %v1505
        %v1521 = vpop.xlane.xlu0 %1520
        %v1522 = vsub.f32 %v1498, %v1507
        %v1523 = vsub.f32 %v1499, %v1509
        %v1524 = vsub.f32 %v1500, %v1511
        %v1525 = vsub.f32 %v1501, %v1513
        %v1526 = vsub.f32 %v1502, %v1515
        %v1527 = vsub.f32 %v1503, %v1517
        %v1528 = vsub.f32 %v1504, %v1519
        %v1529 = vsub.f32 %v1505, %v1521
        %v1530 = vmul.f32 %v1522, 1.442695
        %v1531 = vpow.pop %v1530
        %v1532 = vmul.f32 %v1523, 1.442695
        %v1533 = vpow.pop %v1532
        %v1534 = vmul.f32 %v1524, 1.442695
        %v1535 = vpow.pop %v1534
        %v1536 = vmul.f32 %v1525, 1.442695
        %v1537 = vpow.pop %v1536
        %v1538 = vmul.f32 %v1526, 1.442695
        %v1539 = vpow.pop %v1538
        %v1540 = vmul.f32 %v1527, 1.442695
        %v1541 = vpow.pop %v1540
        %v1542 = vmul.f32 %v1528, 1.442695
        %v1543 = vpow.pop %v1542
        %v1544 = vmul.f32 %v1529, 1.442695
        %v1545 = vpow.pop %v1544
        %1546 = vadd.xlane.f32.xlu0 %v1531
        %v1547 = vpop.xlane.xlu0 %1546
        %1548 = vadd.xlane.f32.xlu0 %v1533
        %v1549 = vpop.xlane.xlu0 %1548
        %1550 = vadd.xlane.f32.xlu0 %v1535
        %v1551 = vpop.xlane.xlu0 %1550
        %1552 = vadd.xlane.f32.xlu0 %v1537
        %v1553 = vpop.xlane.xlu0 %1552
        %1554 = vadd.xlane.f32.xlu0 %v1539
        %v1555 = vpop.xlane.xlu0 %1554
        %1556 = vadd.xlane.f32.xlu0 %v1541
        %v1557 = vpop.xlane.xlu0 %1556
        %1558 = vadd.xlane.f32.xlu0 %v1543
        %v1559 = vpop.xlane.xlu0 %1558
        %1560 = vadd.xlane.f32.xlu0 %v1545
        %v1561 = vpop.xlane.xlu0 %1560
        %v1562 = vrcp.pop %v1547
        %v1563 = vrcp.pop %v1549
        %v1564 = vrcp.pop %v1551
        %v1565 = vrcp.pop %v1553
        %v1566 = vrcp.pop %v1555
        %v1567 = vrcp.pop %v1557
        %v1568 = vrcp.pop %v1559
        %v1569 = vrcp.pop %v1561
        %v1570 = vmul.f32 %v1531, %v1562
        %v1571 = vmul.f32 %v1533, %v1563
        %v1572 = vmul.f32 %v1535, %v1564
        %v1573 = vmul.f32 %v1537, %v1565
        %v1574 = vmul.f32 %v1539, %v1566
        %v1575 = vmul.f32 %v1541, %v1567
        %v1576 = vmul.f32 %v1543, %v1568
        %v1577 = vmul.f32 %v1545, %v1569
        %v1578 = vpack.c.bf16 %v1571, %v1570
        %v1579 = vpack.c.bf16 %v1573, %v1572
        %v1580 = vpack.c.bf16 %v1575, %v1574
        %v1581 = vpack.c.bf16 %v1577, %v1576
        %s1582 = scalar_lea.vmem %s613, 192
        %v1583 = vld [vmem:[%s1582] sm:$0xf]
        %v1584 = vld [vmem:[%s1582 + $0x4] sm:$0xf]
        %v1585 = vld [vmem:[%s1582 + $0x8] sm:$0xf]
        %v1586 = vld [vmem:[%s1582 + $0xc] sm:$0xf]
        %v1587 = vld [vmem:[%s1582 + $0x10] sm:$0xf]
        %v1588 = vld [vmem:[%s1582 + $0x14] sm:$0xf]
        %v1589 = vld [vmem:[%s1582 + $0x18] sm:$0xf]
        %v1590 = vld [vmem:[%s1582 + $0x1c] sm:$0xf]
        %v1591 = vld [vmem:[%s1582 + $0x20] sm:$0xf]
        %v1592 = vld [vmem:[%s1582 + $0x24] sm:$0xf]
        %v1593 = vld [vmem:[%s1582 + $0x28] sm:$0xf]
        %v1594 = vld [vmem:[%s1582 + $0x2c] sm:$0xf]
        %v1595 = vld [vmem:[%s1582 + $0x30] sm:$0xf]
        %v1596 = vld [vmem:[%s1582 + $0x34] sm:$0xf]
        %v1597 = vld [vmem:[%s1582 + $0x38] sm:$0xf]
        %v1598 = vld [vmem:[%s1582 + $0x3c] sm:$0xf]
        %v1615 = vunpack.c.l.b16 %v1583
        %v1616 = vunpack.c.l.b16 %v1584
        %v1617 = vunpack.c.l.b16 %v1585
        %v1618 = vunpack.c.l.b16 %v1586
        %v1619 = vunpack.c.l.b16 %v1587
        %v1620 = vunpack.c.l.b16 %v1588
        %v1621 = vunpack.c.l.b16 %v1589
        %v1622 = vunpack.c.l.b16 %v1590
        %v1623 = vunpack.c.l.b16 %v1591
        %v1624 = vunpack.c.l.b16 %v1592
        %v1625 = vunpack.c.l.b16 %v1593
        %v1626 = vunpack.c.l.b16 %v1594
        %v1627 = vunpack.c.l.b16 %v1595
        %v1628 = vunpack.c.l.b16 %v1596
        %v1629 = vunpack.c.l.b16 %v1597
        %v1630 = vunpack.c.l.b16 %v1598
        %v1631 = vpack.c.b16 %v1616, %v1615
        %v1632 = vpack.c.b16 %v1618, %v1617
        %v1633 = vpack.c.b16 %v1620, %v1619
        %v1634 = vpack.c.b16 %v1622, %v1621
        %v1635 = vpack.c.b16 %v1624, %v1623
        %v1636 = vpack.c.b16 %v1626, %v1625
        %v1637 = vpack.c.b16 %v1628, %v1627
        %v1638 = vpack.c.b16 %v1630, %v1629
        %1647 = vmatpush.bf16.msra.mxu0 %v1638
        %1648 = vmatpush.bf16.msra.mxu0 %v1637
        %1649 = vmatpush.bf16.msra.mxu0 %v1636
        %1650 = vmatpush.bf16.msra.mxu0 %v1635
        %1651 = vmatpush.bf16.msra.mxu0 %v1634
        %1652 = vmatpush.bf16.msra.mxu0 %v1633
        %1653 = vmatpush.bf16.msra.mxu0 %v1632
        %1654 = vmatpush.bf16.msra.mxu0 %v1631
        %1655 = vmatmul.bf16.gmra.mxu0 %v1578
        %v1656 = vpop.f32.mrf.mxu0
        %v1657 = vadd.f32 0.0, %v1656
        %v1658 = vpop.f32.mrf.mxu0
        %v1659 = vadd.f32 0.0, %v1658
        %1660 = vmatmul.bf16.gmra.mxu0 %v1579
        %v1661 = vpop.f32.mrf.mxu0
        %v1662 = vadd.f32 0.0, %v1661
        %v1663 = vpop.f32.mrf.mxu0
        %v1664 = vadd.f32 0.0, %v1663
        %1665 = vmatmul.bf16.gmra.mxu0 %v1580
        %v1666 = vpop.f32.mrf.mxu0
        %v1667 = vadd.f32 0.0, %v1666
        %v1668 = vpop.f32.mrf.mxu0
        %v1669 = vadd.f32 0.0, %v1668
        %1670 = vmatmul.bf16.gmra.mxu0 %v1581
        %v1671 = vpop.f32.mrf.mxu0
        %v1672 = vadd.f32 0.0, %v1671
        %v1673 = vpop.f32.mrf.mxu0
        %v1674 = vadd.f32 0.0, %v1673
        %1675 = vdwg.mxu0
        %1684 = vrot.lane.b32.xlu0 %v1145, 32
        %v1685 = vpop.permute.xlu0 %1684
        %1686 = vrot.lane.b32.xlu0 %v1147, 32
        %v1687 = vpop.permute.xlu0 %1686
        %1688 = vrot.lane.b32.xlu0 %v1150, 32
        %v1689 = vpop.permute.xlu0 %1688
        %1690 = vrot.lane.b32.xlu0 %v1152, 32
        %v1691 = vpop.permute.xlu0 %1690
        %1692 = vrot.lane.b32.xlu0 %v1155, 32
        %v1693 = vpop.permute.xlu0 %1692
        %1694 = vrot.lane.b32.xlu0 %v1157, 32
        %v1695 = vpop.permute.xlu0 %1694
        %1696 = vrot.lane.b32.xlu0 %v1160, 32
        %v1697 = vpop.permute.xlu0 %1696
        %1698 = vrot.lane.b32.xlu0 %v1162, 32
        %v1699 = vpop.permute.xlu0 %1698
        %1716 = vrot.lane.b32.xlu0 %v1401, 64
        %v1717 = vpop.permute.xlu0 %1716
        %1718 = vrot.lane.b32.xlu0 %v1403, 64
        %v1719 = vpop.permute.xlu0 %1718
        %1720 = vrot.lane.b32.xlu0 %v1406, 64
        %v1721 = vpop.permute.xlu0 %1720
        %1722 = vrot.lane.b32.xlu0 %v1408, 64
        %v1723 = vpop.permute.xlu0 %1722
        %1724 = vrot.lane.b32.xlu0 %v1411, 64
        %v1725 = vpop.permute.xlu0 %1724
        %1726 = vrot.lane.b32.xlu0 %v1413, 64
        %v1727 = vpop.permute.xlu0 %1726
        %1728 = vrot.lane.b32.xlu0 %v1416, 64
        %v1729 = vpop.permute.xlu0 %1728
        %1730 = vrot.lane.b32.xlu0 %v1418, 64
        %v1731 = vpop.permute.xlu0 %1730
        %1748 = vrot.lane.b32.xlu0 %v1657, 96
        %v1749 = vpop.permute.xlu0 %1748
        %1750 = vrot.lane.b32.xlu0 %v1659, 96
        %v1751 = vpop.permute.xlu0 %1750
        %1752 = vrot.lane.b32.xlu0 %v1662, 96
        %v1753 = vpop.permute.xlu0 %1752
        %1754 = vrot.lane.b32.xlu0 %v1664, 96
        %v1755 = vpop.permute.xlu0 %1754
        %1756 = vrot.lane.b32.xlu0 %v1667, 96
        %v1757 = vpop.permute.xlu0 %1756
        %1758 = vrot.lane.b32.xlu0 %v1669, 96
        %v1759 = vpop.permute.xlu0 %1758
        %1760 = vrot.lane.b32.xlu0 %v1672, 96
        %v1761 = vpop.permute.xlu0 %1760
        %1762 = vrot.lane.b32.xlu0 %v1674, 96
        %v1763 = vpop.permute.xlu0 %1762
        %vm1772 = vcmask 261120
        %v1773 = vsel %vm1772, %v889, %v1685
        %v1774 = vsel %vm1772, %v891, %v1687
        %v1775 = vsel %vm1772, %v894, %v1689
        %v1776 = vsel %vm1772, %v896, %v1691
        %v1777 = vsel %vm1772, %v899, %v1693
        %v1778 = vsel %vm1772, %v901, %v1695
        %v1779 = vsel %vm1772, %v904, %v1697
        %v1780 = vsel %vm1772, %v906, %v1699
        %vm1781 = vcmask 523264
        %v1782 = vsel %vm1781, %v1773, %v1717
        %v1783 = vsel %vm1781, %v1774, %v1719
        %v1784 = vsel %vm1781, %v1775, %v1721
        %v1785 = vsel %vm1781, %v1776, %v1723
        %v1786 = vsel %vm1781, %v1777, %v1725
        %v1787 = vsel %vm1781, %v1778, %v1727
        %v1788 = vsel %vm1781, %v1779, %v1729
        %v1789 = vsel %vm1781, %v1780, %v1731
        %vm1790 = vcmask 785408
        %v1791 = vsel %vm1790, %v1782, %v1749
        %v1792 = vsel %vm1790, %v1783, %v1751
        %v1793 = vsel %vm1790, %v1784, %v1753
        %v1794 = vsel %vm1790, %v1785, %v1755
        %v1795 = vsel %vm1790, %v1786, %v1757
        %v1796 = vsel %vm1790, %v1787, %v1759
        %v1797 = vsel %vm1790, %v1788, %v1761
        %v1798 = vsel %vm1790, %v1789, %v1763
        %v1799 = vld [vmem:[%s621] sm:$0x1]
        %v1801 = vperm.slane %v1799, 0
        %v1803 = vadd.f32 %v1791, %v1801
        %v1804 = vadd.f32 %v1792, %v1801
        %v1805 = vadd.f32 %v1793, %v1801
        %v1806 = vadd.f32 %v1794, %v1801
        %v1807 = vadd.f32 %v1795, %v1801
        %v1808 = vadd.f32 %v1796, %v1801
        %v1809 = vadd.f32 %v1797, %v1801
        %v1810 = vadd.f32 %v1798, %v1801
        %vm1811 = vcmp.gt.f32.partialorder %v1803, 0.0
        %vm1812 = vcmp.gt.f32.partialorder %v1804, 0.0
        %vm1813 = vcmp.gt.f32.partialorder %v1805, 0.0
        %vm1814 = vcmp.gt.f32.partialorder %v1806, 0.0
        %vm1815 = vcmp.gt.f32.partialorder %v1807, 0.0
        %vm1816 = vcmp.gt.f32.partialorder %v1808, 0.0
        %vm1817 = vcmp.gt.f32.partialorder %v1809, 0.0
        %vm1818 = vcmp.gt.f32.partialorder %v1810, 0.0
        %v1819 = vmin.f32 %v1803, 0.0
        %v1820 = vmin.f32 %v1804, 0.0
        %v1821 = vmin.f32 %v1805, 0.0
        %v1822 = vmin.f32 %v1806, 0.0
        %v1823 = vmin.f32 %v1807, 0.0
        %v1824 = vmin.f32 %v1808, 0.0
        %v1825 = vmin.f32 %v1809, 0.0
        %v1826 = vmin.f32 %v1810, 0.0
        %v1827 = vmul.f32 %v1819, 1.442695
        %v1828 = vpow.pop %v1827
        %v1829 = vmul.f32 %v1820, 1.442695
        %v1830 = vpow.pop %v1829
        %v1831 = vmul.f32 %v1821, 1.442695
        %v1832 = vpow.pop %v1831
        %v1833 = vmul.f32 %v1822, 1.442695
        %v1834 = vpow.pop %v1833
        %v1835 = vmul.f32 %v1823, 1.442695
        %v1836 = vpow.pop %v1835
        %v1837 = vmul.f32 %v1824, 1.442695
        %v1838 = vpow.pop %v1837
        %v1839 = vmul.f32 %v1825, 1.442695
        %v1840 = vpow.pop %v1839
        %v1841 = vmul.f32 %v1826, 1.442695
        %v1842 = vpow.pop %v1841
        %v1843 = vsub.f32 %v1828, 1.0
        %v1844 = vsub.f32 %v1830, 1.0
        %v1845 = vsub.f32 %v1832, 1.0
        %v1846 = vsub.f32 %v1834, 1.0
        %v1847 = vsub.f32 %v1836, 1.0
        %v1848 = vsub.f32 %v1838, 1.0
        %v1849 = vsub.f32 %v1840, 1.0
        %v1850 = vsub.f32 %v1842, 1.0
        %v1851 = vsel %vm1811, %v1803, %v1843
        %v1852 = vsel %vm1812, %v1804, %v1844
        %v1853 = vsel %vm1813, %v1805, %v1845
        %v1854 = vsel %vm1814, %v1806, %v1846
        %v1855 = vsel %vm1815, %v1807, %v1847
        %v1856 = vsel %vm1816, %v1808, %v1848
        %v1857 = vsel %vm1817, %v1809, %v1849
        %v1858 = vsel %vm1818, %v1810, %v1850
        %v1859 = vld [vmem:[%s5] sm:$0x1]
        %v1860 = vld [vmem:[%s6] sm:$0x1]
        %1861 = vadd.xlane.f32.xlu0 %v1851
        %v1862 = vpop.xlane.xlu0 %1861
        %1863 = vadd.xlane.f32.xlu0 %v1852
        %v1864 = vpop.xlane.xlu0 %1863
        %1865 = vadd.xlane.f32.xlu0 %v1853
        %v1866 = vpop.xlane.xlu0 %1865
        %1867 = vadd.xlane.f32.xlu0 %v1854
        %v1868 = vpop.xlane.xlu0 %1867
        %1869 = vadd.xlane.f32.xlu0 %v1855
        %v1870 = vpop.xlane.xlu0 %1869
        %1871 = vadd.xlane.f32.xlu0 %v1856
        %v1872 = vpop.xlane.xlu0 %1871
        %1873 = vadd.xlane.f32.xlu0 %v1857
        %v1874 = vpop.xlane.xlu0 %1873
        %1875 = vadd.xlane.f32.xlu0 %v1858
        %v1876 = vpop.xlane.xlu0 %1875
        %v1877 = vrcp.pop 128.0
        %v1878 = vmul.f32 128.0, %v1877
        %v1879 = vsub.f32 1.0, %v1878
        %v1880 = vmul.f32 %v1877, %v1879
        %v1881 = vadd.f32 %v1877, %v1880
        %vm1882 = vweird.f32 %v1877
        %v1883 = vsel %vm1882, %v1877, %v1881
        %v1884 = vmul.f32 %v1862, %v1883
        %v1885 = vmul.f32 %v1864, %v1883
        %v1886 = vmul.f32 %v1866, %v1883
        %v1887 = vmul.f32 %v1868, %v1883
        %v1888 = vmul.f32 %v1870, %v1883
        %v1889 = vmul.f32 %v1872, %v1883
        %v1890 = vmul.f32 %v1874, %v1883
        %v1891 = vmul.f32 %v1876, %v1883
        %v1892 = vsub.f32 %v1851, %v1884
        %v1893 = vsub.f32 %v1852, %v1885
        %v1894 = vsub.f32 %v1853, %v1886
        %v1895 = vsub.f32 %v1854, %v1887
        %v1896 = vsub.f32 %v1855, %v1888
        %v1897 = vsub.f32 %v1856, %v1889
        %v1898 = vsub.f32 %v1857, %v1890
        %v1899 = vsub.f32 %v1858, %v1891
        %v1900 = vmul.f32 %v1892, %v1892
        %v1901 = vmul.f32 %v1893, %v1893
        %v1902 = vmul.f32 %v1894, %v1894
        %v1903 = vmul.f32 %v1895, %v1895
        %v1904 = vmul.f32 %v1896, %v1896
        %v1905 = vmul.f32 %v1897, %v1897
        %v1906 = vmul.f32 %v1898, %v1898
        %v1907 = vmul.f32 %v1899, %v1899
        %1908 = vadd.xlane.f32.xlu0 %v1900
        %v1909 = vpop.xlane.xlu0 %1908
        %1910 = vadd.xlane.f32.xlu0 %v1901
        %v1911 = vpop.xlane.xlu0 %1910
        %1912 = vadd.xlane.f32.xlu0 %v1902
        %v1913 = vpop.xlane.xlu0 %1912
        %1914 = vadd.xlane.f32.xlu0 %v1903
        %v1915 = vpop.xlane.xlu0 %1914
        %1916 = vadd.xlane.f32.xlu0 %v1904
        %v1917 = vpop.xlane.xlu0 %1916
        %1918 = vadd.xlane.f32.xlu0 %v1905
        %v1919 = vpop.xlane.xlu0 %1918
        %1920 = vadd.xlane.f32.xlu0 %v1906
        %v1921 = vpop.xlane.xlu0 %1920
        %1922 = vadd.xlane.f32.xlu0 %v1907
        %v1923 = vpop.xlane.xlu0 %1922
        %v1924 = vmul.f32 %v1909, %v1883
        %v1925 = vmul.f32 %v1911, %v1883
        %v1926 = vmul.f32 %v1913, %v1883
        %v1927 = vmul.f32 %v1915, %v1883
        %v1928 = vmul.f32 %v1917, %v1883
        %v1929 = vmul.f32 %v1919, %v1883
        %v1930 = vmul.f32 %v1921, %v1883
        %v1931 = vmul.f32 %v1923, %v1883
        %v1932 = vadd.f32 %v1924, 1e-05
        %v1933 = vadd.f32 %v1925, 1e-05
        %v1934 = vadd.f32 %v1926, 1e-05
        %v1935 = vadd.f32 %v1927, 1e-05
        %v1936 = vadd.f32 %v1928, 1e-05
        %v1937 = vadd.f32 %v1929, 1e-05
        %v1938 = vadd.f32 %v1930, 1e-05
        %v1939 = vadd.f32 %v1931, 1e-05
        %v1940 = vrsqrt.pop %v1932
        %v1941 = vmul.f32 %v1940, %v1932
        %v1942 = vmul.f32 %v1941, %v1940
        %v1943 = vmul.f32 0.5, %v1942
        %v1944 = vsub.f32 1.5, %v1943
        %v1945 = vmul.f32 %v1940, %v1944
        %vm1946 = vweird.f32 %v1932
        %vm1947 = vweird.f32 %v1940
        %vm1948 = vmor %vm1946, %vm1947
        %v1949 = vsel %vm1948, %v1940, %v1945
        %v1950 = vrsqrt.pop %v1933
        %v1951 = vmul.f32 %v1950, %v1933
        %v1952 = vmul.f32 %v1951, %v1950
        %v1953 = vmul.f32 0.5, %v1952
        %v1954 = vsub.f32 1.5, %v1953
        %v1955 = vmul.f32 %v1950, %v1954
        %vm1956 = vweird.f32 %v1933
        %vm1957 = vweird.f32 %v1950
        %vm1958 = vmor %vm1956, %vm1957
        %v1959 = vsel %vm1958, %v1950, %v1955
        %v1960 = vrsqrt.pop %v1934
        %v1961 = vmul.f32 %v1960, %v1934
        %v1962 = vmul.f32 %v1961, %v1960
        %v1963 = vmul.f32 0.5, %v1962
        %v1964 = vsub.f32 1.5, %v1963
        %v1965 = vmul.f32 %v1960, %v1964
        %vm1966 = vweird.f32 %v1934
        %vm1967 = vweird.f32 %v1960
        %vm1968 = vmor %vm1966, %vm1967
        %v1969 = vsel %vm1968, %v1960, %v1965
        %v1970 = vrsqrt.pop %v1935
        %v1971 = vmul.f32 %v1970, %v1935
        %v1972 = vmul.f32 %v1971, %v1970
        %v1973 = vmul.f32 0.5, %v1972
        %v1974 = vsub.f32 1.5, %v1973
        %v1975 = vmul.f32 %v1970, %v1974
        %vm1976 = vweird.f32 %v1935
        %vm1977 = vweird.f32 %v1970
        %vm1978 = vmor %vm1976, %vm1977
        %v1979 = vsel %vm1978, %v1970, %v1975
        %v1980 = vrsqrt.pop %v1936
        %v1981 = vmul.f32 %v1980, %v1936
        %v1982 = vmul.f32 %v1981, %v1980
        %v1983 = vmul.f32 0.5, %v1982
        %v1984 = vsub.f32 1.5, %v1983
        %v1985 = vmul.f32 %v1980, %v1984
        %vm1986 = vweird.f32 %v1936
        %vm1987 = vweird.f32 %v1980
        %vm1988 = vmor %vm1986, %vm1987
        %v1989 = vsel %vm1988, %v1980, %v1985
        %v1990 = vrsqrt.pop %v1937
        %v1991 = vmul.f32 %v1990, %v1937
        %v1992 = vmul.f32 %v1991, %v1990
        %v1993 = vmul.f32 0.5, %v1992
        %v1994 = vsub.f32 1.5, %v1993
        %v1995 = vmul.f32 %v1990, %v1994
        %vm1996 = vweird.f32 %v1937
        %vm1997 = vweird.f32 %v1990
        %vm1998 = vmor %vm1996, %vm1997
        %v1999 = vsel %vm1998, %v1990, %v1995
        %v2000 = vrsqrt.pop %v1938
        %v2001 = vmul.f32 %v2000, %v1938
        %v2002 = vmul.f32 %v2001, %v2000
        %v2003 = vmul.f32 0.5, %v2002
        %v2004 = vsub.f32 1.5, %v2003
        %v2005 = vmul.f32 %v2000, %v2004
        %vm2006 = vweird.f32 %v1938
        %vm2007 = vweird.f32 %v2000
        %vm2008 = vmor %vm2006, %vm2007
        %v2009 = vsel %vm2008, %v2000, %v2005
        %v2010 = vrsqrt.pop %v1939
        %v2011 = vmul.f32 %v2010, %v1939
        %v2012 = vmul.f32 %v2011, %v2010
        %v2013 = vmul.f32 0.5, %v2012
        %v2014 = vsub.f32 1.5, %v2013
        %v2015 = vmul.f32 %v2010, %v2014
        %vm2016 = vweird.f32 %v1939
        %vm2017 = vweird.f32 %v2010
        %vm2018 = vmor %vm2016, %vm2017
        %v2019 = vsel %vm2018, %v2010, %v2015
        %v2020 = vmul.f32 %v1892, %v1949
        %v2021 = vmul.f32 %v1893, %v1959
        %v2022 = vmul.f32 %v1894, %v1969
        %v2023 = vmul.f32 %v1895, %v1979
        %v2024 = vmul.f32 %v1896, %v1989
        %v2025 = vmul.f32 %v1897, %v1999
        %v2026 = vmul.f32 %v1898, %v2009
        %v2027 = vmul.f32 %v1899, %v2019
        %v2029 = vperm.slane %v1859, 0
        %v2031 = vmul.f32 %v2020, %v2029
        %v2032 = vmul.f32 %v2021, %v2029
        %v2033 = vmul.f32 %v2022, %v2029
        %v2034 = vmul.f32 %v2023, %v2029
        %v2035 = vmul.f32 %v2024, %v2029
        %v2036 = vmul.f32 %v2025, %v2029
        %v2037 = vmul.f32 %v2026, %v2029
        %v2038 = vmul.f32 %v2027, %v2029
        %v2040 = vperm.slane %v1860, 0
        %v2042 = vadd.f32 %v2031, %v2040
        %v2043 = vadd.f32 %v2032, %v2040
        %v2044 = vadd.f32 %v2033, %v2040
        %v2045 = vadd.f32 %v2034, %v2040
        %v2046 = vadd.f32 %v2035, %v2040
        %v2047 = vadd.f32 %v2036, %v2040
        %v2048 = vadd.f32 %v2037, %v2040
        %v2049 = vadd.f32 %v2038, %v2040
        %s2050 = smul.u32 %s29, 64
        %s2051 = scalar_lea.vmem [#allocation2], %s2050
        %2052 = vst [vmem:[%s2051] sm:$0xff] %v2042
        %2053 = vst [vmem:[%s2051 + $0x8] sm:$0xff] %v2043
        %2054 = vst [vmem:[%s2051 + $0x10] sm:$0xff] %v2044
        %2055 = vst [vmem:[%s2051 + $0x18] sm:$0xff] %v2045
        %2056 = vst [vmem:[%s2051 + $0x20] sm:$0xff] %v2046
        %2057 = vst [vmem:[%s2051 + $0x28] sm:$0xff] %v2047
        %2058 = vst [vmem:[%s2051 + $0x30] sm:$0xff] %v2048
        %2059 = vst [vmem:[%s2051 + $0x38] sm:$0xff] %v2049
        %p2060 = scmp.eq.s32.totalorder %s29, 2
        // Predicated region
        $region99: #{tpu_custom_call.1} parent=93 // pred_check
          %p2061 = pneg %p2060
        $region100: #{tpu_custom_call.1} parent=93 // pred_check_branch
          %2063 = sbr.rel (%p2061) target = $region102
        $region101: #{tpu_custom_call.1} parent=93 // pred_region
          %v2064 = vld [vmem:[%s7] sm:$0xf]
          %v2065 = vld [vmem:[%s7 + $0x4] sm:$0xf]
          %v2066 = vld [vmem:[%s7 + $0x8] sm:$0xf]
          %v2067 = vld [vmem:[%s7 + $0xc] sm:$0xf]
          %v2068 = vld [vmem:[%s7 + $0x10] sm:$0xf]
          %v2069 = vld [vmem:[%s7 + $0x14] sm:$0xf]
          %v2070 = vld [vmem:[%s7 + $0x18] sm:$0xf]
          %v2071 = vld [vmem:[%s7 + $0x1c] sm:$0xf]
          %v2072 = vld [vmem:[%s7 + $0x20] sm:$0xf]
          %v2073 = vld [vmem:[%s7 + $0x24] sm:$0xf]
          %v2074 = vld [vmem:[%s7 + $0x28] sm:$0xf]
          %v2075 = vld [vmem:[%s7 + $0x2c] sm:$0xf]
          %v2076 = vld [vmem:[%s7 + $0x30] sm:$0xf]
          %v2077 = vld [vmem:[%s7 + $0x34] sm:$0xf]
          %v2078 = vld [vmem:[%s7 + $0x38] sm:$0xf]
          %v2079 = vld [vmem:[%s7 + $0x3c] sm:$0xf]
          %v2080 = vld [vmem:[%s8] sm:$0x1]
          %v2081 = vld [vmem:[%s9] sm:$0x1]
          %v2082 = vld [vmem:[#allocation2] sm:$0xff]
          %v2083 = vld [vmem:[#allocation2 + $0x8] sm:$0xff]
          %v2084 = vld [vmem:[#allocation2 + $0x10] sm:$0xff]
          %v2085 = vld [vmem:[#allocation2 + $0x18] sm:$0xff]
          %v2086 = vld [vmem:[#allocation2 + $0x20] sm:$0xff]
          %v2087 = vld [vmem:[#allocation2 + $0x28] sm:$0xff]
          %v2088 = vld [vmem:[#allocation2 + $0x30] sm:$0xff]
          %v2089 = vld [vmem:[#allocation2 + $0x38] sm:$0xff]
          %v2090 = vpack.c.bf16 %v2083, %v2082
          %v2091 = vpack.c.bf16 %v2085, %v2084
          %v2092 = vpack.c.bf16 %v2087, %v2086
          %v2093 = vpack.c.bf16 %v2089, %v2088
          %v2095 = vperm.slane %v2080, 0
          %v2113 = vunpack.c.l.b16 %v2064
          %v2114 = vunpack.c.l.b16 %v2065
          %v2115 = vunpack.c.l.b16 %v2066
          %v2116 = vunpack.c.l.b16 %v2067
          %v2117 = vunpack.c.l.b16 %v2068
          %v2118 = vunpack.c.l.b16 %v2069
          %v2119 = vunpack.c.l.b16 %v2070
          %v2120 = vunpack.c.l.b16 %v2071
          %v2121 = vunpack.c.l.b16 %v2072
          %v2122 = vunpack.c.l.b16 %v2073
          %v2123 = vunpack.c.l.b16 %v2074
          %v2124 = vunpack.c.l.b16 %v2075
          %v2125 = vunpack.c.l.b16 %v2076
          %v2126 = vunpack.c.l.b16 %v2077
          %v2127 = vunpack.c.l.b16 %v2078
          %v2128 = vunpack.c.l.b16 %v2079
          %v2129 = vpack.c.b16 %v2114, %v2113
          %v2130 = vpack.c.b16 %v2116, %v2115
          %v2131 = vpack.c.b16 %v2118, %v2117
          %v2132 = vpack.c.b16 %v2120, %v2119
          %v2133 = vpack.c.b16 %v2122, %v2121
          %v2134 = vpack.c.b16 %v2124, %v2123
          %v2135 = vpack.c.b16 %v2126, %v2125
          %v2136 = vpack.c.b16 %v2128, %v2127
          %2145 = vmatpush.bf16.msra.mxu0 %v2136
          %2146 = vmatpush.bf16.msra.mxu0 %v2135
          %2147 = vmatpush.bf16.msra.mxu0 %v2134
          %2148 = vmatpush.bf16.msra.mxu0 %v2133
          %2149 = vmatpush.bf16.msra.mxu0 %v2132
          %2150 = vmatpush.bf16.msra.mxu0 %v2131
          %2151 = vmatpush.bf16.msra.mxu0 %v2130
          %2152 = vmatpush.bf16.msra.mxu0 %v2129
          %2153 = vmatmul.bf16.gmra.mxu0 %v2090
          %v2154 = vpop.f32.mrf.mxu0
          %v2155 = vadd.f32 %v2095, %v2154
          %v2156 = vpop.f32.mrf.mxu0
          %v2157 = vadd.f32 %v2095, %v2156
          %2158 = vmatmul.bf16.gmra.mxu0 %v2091
          %v2159 = vpop.f32.mrf.mxu0
          %v2160 = vadd.f32 %v2095, %v2159
          %v2161 = vpop.f32.mrf.mxu0
          %v2162 = vadd.f32 %v2095, %v2161
          %2163 = vmatmul.bf16.gmra.mxu0 %v2092
          %v2164 = vpop.f32.mrf.mxu0
          %v2165 = vadd.f32 %v2095, %v2164
          %v2166 = vpop.f32.mrf.mxu0
          %v2167 = vadd.f32 %v2095, %v2166
          %2168 = vmatmul.bf16.gmra.mxu0 %v2093
          %v2169 = vpop.f32.mrf.mxu0
          %v2170 = vadd.f32 %v2095, %v2169
          %v2171 = vpop.f32.mrf.mxu0
          %v2172 = vadd.f32 %v2095, %v2171
          %2173 = vdwg.mxu0
          %v2174 = vtanh.pop %v2155
          %v2175 = vtanh.pop %v2157
          %v2176 = vtanh.pop %v2160
          %v2177 = vtanh.pop %v2162
          %v2178 = vtanh.pop %v2165
          %v2179 = vtanh.pop %v2167
          %v2180 = vtanh.pop %v2170
          %v2181 = vtanh.pop %v2172
          %v2183 = vperm.slane %v2081, 0
          %v2185 = vmul.f32 %v2174, %v2183
          %v2186 = vmul.f32 %v2175, %v2183
          %v2187 = vmul.f32 %v2176, %v2183
          %v2188 = vmul.f32 %v2177, %v2183
          %v2189 = vmul.f32 %v2178, %v2183
          %v2190 = vmul.f32 %v2179, %v2183
          %v2191 = vmul.f32 %v2180, %v2183
          %v2192 = vmul.f32 %v2181, %v2183
          %2193 = vadd.xlane.f32.xlu0 %v2185
          %v2194 = vpop.xlane.xlu0 %2193
          %2195 = vadd.xlane.f32.xlu0 %v2186
          %v2196 = vpop.xlane.xlu0 %2195
          %2197 = vadd.xlane.f32.xlu0 %v2187
          %v2198 = vpop.xlane.xlu0 %2197
          %2199 = vadd.xlane.f32.xlu0 %v2188
          %v2200 = vpop.xlane.xlu0 %2199
          %2201 = vadd.xlane.f32.xlu0 %v2189
          %v2202 = vpop.xlane.xlu0 %2201
          %2203 = vadd.xlane.f32.xlu0 %v2190
          %v2204 = vpop.xlane.xlu0 %2203
          %2205 = vadd.xlane.f32.xlu0 %v2191
          %v2206 = vpop.xlane.xlu0 %2205
          %2207 = vadd.xlane.f32.xlu0 %v2192
          %v2208 = vpop.xlane.xlu0 %2207
          %s2209 = scalar_lea.vmem [#allocation2], 64
          %v2210 = vld [vmem:[%s2209] sm:$0xff]
          %v2211 = vld [vmem:[%s2209 + $0x8] sm:$0xff]
          %v2212 = vld [vmem:[%s2209 + $0x10] sm:$0xff]
          %v2213 = vld [vmem:[%s2209 + $0x18] sm:$0xff]
          %v2214 = vld [vmem:[%s2209 + $0x20] sm:$0xff]
          %v2215 = vld [vmem:[%s2209 + $0x28] sm:$0xff]
          %v2216 = vld [vmem:[%s2209 + $0x30] sm:$0xff]
          %v2217 = vld [vmem:[%s2209 + $0x38] sm:$0xff]
          %v2218 = vpack.c.bf16 %v2211, %v2210
          %v2219 = vpack.c.bf16 %v2213, %v2212
          %v2220 = vpack.c.bf16 %v2215, %v2214
          %v2221 = vpack.c.bf16 %v2217, %v2216
          %2222 = vmatpush.bf16.msra.mxu0 %v2136
          %2223 = vmatpush.bf16.msra.mxu0 %v2135
          %2224 = vmatpush.bf16.msra.mxu0 %v2134
          %2225 = vmatpush.bf16.msra.mxu0 %v2133
          %2226 = vmatpush.bf16.msra.mxu0 %v2132
          %2227 = vmatpush.bf16.msra.mxu0 %v2131
          %2228 = vmatpush.bf16.msra.mxu0 %v2130
          %2229 = vmatpush.bf16.msra.mxu0 %v2129
          %2230 = vmatmul.bf16.gmra.mxu0 %v2218
          %v2231 = vpop.f32.mrf.mxu0
          %v2232 = vadd.f32 %v2095, %v2231
          %v2233 = vpop.f32.mrf.mxu0
          %v2234 = vadd.f32 %v2095, %v2233
          %2235 = vmatmul.bf16.gmra.mxu0 %v2219
          %v2236 = vpop.f32.mrf.mxu0
          %v2237 = vadd.f32 %v2095, %v2236
          %v2238 = vpop.f32.mrf.mxu0
          %v2239 = vadd.f32 %v2095, %v2238
          %2240 = vmatmul.bf16.gmra.mxu0 %v2220
          %v2241 = vpop.f32.mrf.mxu0
          %v2242 = vadd.f32 %v2095, %v2241
          %v2243 = vpop.f32.mrf.mxu0
          %v2244 = vadd.f32 %v2095, %v2243
          %2245 = vmatmul.bf16.gmra.mxu0 %v2221
          %v2246 = vpop.f32.mrf.mxu0
          %v2247 = vadd.f32 %v2095, %v2246
          %v2248 = vpop.f32.mrf.mxu0
          %v2249 = vadd.f32 %v2095, %v2248
          %2250 = vdwg.mxu0
          %v2251 = vtanh.pop %v2232
          %v2252 = vtanh.pop %v2234
          %v2253 = vtanh.pop %v2237
          %v2254 = vtanh.pop %v2239
          %v2255 = vtanh.pop %v2242
          %v2256 = vtanh.pop %v2244
          %v2257 = vtanh.pop %v2247
          %v2258 = vtanh.pop %v2249
          %v2259 = vmul.f32 %v2251, %v2183
          %v2260 = vmul.f32 %v2252, %v2183
          %v2261 = vmul.f32 %v2253, %v2183
          %v2262 = vmul.f32 %v2254, %v2183
          %v2263 = vmul.f32 %v2255, %v2183
          %v2264 = vmul.f32 %v2256, %v2183
          %v2265 = vmul.f32 %v2257, %v2183
          %v2266 = vmul.f32 %v2258, %v2183
          %2267 = vadd.xlane.f32.xlu0 %v2259
          %v2268 = vpop.xlane.xlu0 %2267
          %2269 = vadd.xlane.f32.xlu0 %v2260
          %v2270 = vpop.xlane.xlu0 %2269
          %2271 = vadd.xlane.f32.xlu0 %v2261
          %v2272 = vpop.xlane.xlu0 %2271
          %2273 = vadd.xlane.f32.xlu0 %v2262
          %v2274 = vpop.xlane.xlu0 %2273
          %2275 = vadd.xlane.f32.xlu0 %v2263
          %v2276 = vpop.xlane.xlu0 %2275
          %2277 = vadd.xlane.f32.xlu0 %v2264
          %v2278 = vpop.xlane.xlu0 %2277
          %2279 = vadd.xlane.f32.xlu0 %v2265
          %v2280 = vpop.xlane.xlu0 %2279
          %2281 = vadd.xlane.f32.xlu0 %v2266
          %v2282 = vpop.xlane.xlu0 %2281
          %s2283 = scalar_lea.vmem [#allocation2], 128
          %v2284 = vld [vmem:[%s2283] sm:$0xff]
          %v2285 = vld [vmem:[%s2283 + $0x8] sm:$0xff]
          %v2286 = vld [vmem:[%s2283 + $0x10] sm:$0xff]
          %v2287 = vld [vmem:[%s2283 + $0x18] sm:$0xff]
          %v2288 = vld [vmem:[%s2283 + $0x20] sm:$0xff]
          %v2289 = vld [vmem:[%s2283 + $0x28] sm:$0xff]
          %v2290 = vld [vmem:[%s2283 + $0x30] sm:$0xff]
          %v2291 = vld [vmem:[%s2283 + $0x38] sm:$0xff]
          %v2292 = vpack.c.bf16 %v2285, %v2284
          %v2293 = vpack.c.bf16 %v2287, %v2286
          %v2294 = vpack.c.bf16 %v2289, %v2288
          %v2295 = vpack.c.bf16 %v2291, %v2290
          %2296 = vmatpush.bf16.msra.mxu0 %v2136
          %2297 = vmatpush.bf16.msra.mxu0 %v2135
          %2298 = vmatpush.bf16.msra.mxu0 %v2134
          %2299 = vmatpush.bf16.msra.mxu0 %v2133
          %2300 = vmatpush.bf16.msra.mxu0 %v2132
          %2301 = vmatpush.bf16.msra.mxu0 %v2131
          %2302 = vmatpush.bf16.msra.mxu0 %v2130
          %2303 = vmatpush.bf16.msra.mxu0 %v2129
          %2304 = vmatmul.bf16.gmra.mxu0 %v2292
          %v2305 = vpop.f32.mrf.mxu0
          %v2306 = vadd.f32 %v2095, %v2305
          %v2307 = vpop.f32.mrf.mxu0
          %v2308 = vadd.f32 %v2095, %v2307
          %2309 = vmatmul.bf16.gmra.mxu0 %v2293
          %v2310 = vpop.f32.mrf.mxu0
          %v2311 = vadd.f32 %v2095, %v2310
          %v2312 = vpop.f32.mrf.mxu0
          %v2313 = vadd.f32 %v2095, %v2312
          %2314 = vmatmul.bf16.gmra.mxu0 %v2294
          %v2315 = vpop.f32.mrf.mxu0
          %v2316 = vadd.f32 %v2095, %v2315
          %v2317 = vpop.f32.mrf.mxu0
          %v2318 = vadd.f32 %v2095, %v2317
          %2319 = vmatmul.bf16.gmra.mxu0 %v2295
          %v2320 = vpop.f32.mrf.mxu0
          %v2321 = vadd.f32 %v2095, %v2320
          %v2322 = vpop.f32.mrf.mxu0
          %v2323 = vadd.f32 %v2095, %v2322
          %2324 = vdwg.mxu0
          %v2325 = vtanh.pop %v2306
          %v2326 = vtanh.pop %v2308
          %v2327 = vtanh.pop %v2311
          %v2328 = vtanh.pop %v2313
          %v2329 = vtanh.pop %v2316
          %v2330 = vtanh.pop %v2318
          %v2331 = vtanh.pop %v2321
          %v2332 = vtanh.pop %v2323
          %v2333 = vmul.f32 %v2325, %v2183
          %v2334 = vmul.f32 %v2326, %v2183
          %v2335 = vmul.f32 %v2327, %v2183
          %v2336 = vmul.f32 %v2328, %v2183
          %v2337 = vmul.f32 %v2329, %v2183
          %v2338 = vmul.f32 %v2330, %v2183
          %v2339 = vmul.f32 %v2331, %v2183
          %v2340 = vmul.f32 %v2332, %v2183
          %2341 = vadd.xlane.f32.xlu0 %v2333
          %v2342 = vpop.xlane.xlu0 %2341
          %2343 = vadd.xlane.f32.xlu0 %v2334
          %v2344 = vpop.xlane.xlu0 %2343
          %2345 = vadd.xlane.f32.xlu0 %v2335
          %v2346 = vpop.xlane.xlu0 %2345
          %2347 = vadd.xlane.f32.xlu0 %v2336
          %v2348 = vpop.xlane.xlu0 %2347
          %2349 = vadd.xlane.f32.xlu0 %v2337
          %v2350 = vpop.xlane.xlu0 %2349
          %2351 = vadd.xlane.f32.xlu0 %v2338
          %v2352 = vpop.xlane.xlu0 %2351
          %2353 = vadd.xlane.f32.xlu0 %v2339
          %v2354 = vpop.xlane.xlu0 %2353
          %2355 = vadd.xlane.f32.xlu0 %v2340
          %v2356 = vpop.xlane.xlu0 %2355
          %v2357 = vmax.f32 %v2194, %v2268
          %v2358 = vmax.f32 %v2196, %v2270
          %v2359 = vmax.f32 %v2198, %v2272
          %v2360 = vmax.f32 %v2200, %v2274
          %v2361 = vmax.f32 %v2202, %v2276
          %v2362 = vmax.f32 %v2204, %v2278
          %v2363 = vmax.f32 %v2206, %v2280
          %v2364 = vmax.f32 %v2208, %v2282
          %v2365 = vmax.f32 %v2357, %v2342
          %v2366 = vmax.f32 %v2358, %v2344
          %v2367 = vmax.f32 %v2359, %v2346
          %v2368 = vmax.f32 %v2360, %v2348
          %v2369 = vmax.f32 %v2361, %v2350
          %v2370 = vmax.f32 %v2362, %v2352
          %v2371 = vmax.f32 %v2363, %v2354
          %v2372 = vmax.f32 %v2364, %v2356
          %v2373 = vsub.f32 %v2194, %v2365
          %v2374 = vsub.f32 %v2196, %v2366
          %v2375 = vsub.f32 %v2198, %v2367
          %v2376 = vsub.f32 %v2200, %v2368
          %v2377 = vsub.f32 %v2202, %v2369
          %v2378 = vsub.f32 %v2204, %v2370
          %v2379 = vsub.f32 %v2206, %v2371
          %v2380 = vsub.f32 %v2208, %v2372
          %v2381 = vmul.f32 %v2373, 1.442695
          %v2382 = vpow.pop %v2381
          %v2383 = vmul.f32 %v2374, 1.442695
          %v2384 = vpow.pop %v2383
          %v2385 = vmul.f32 %v2375, 1.442695
          %v2386 = vpow.pop %v2385
          %v2387 = vmul.f32 %v2376, 1.442695
          %v2388 = vpow.pop %v2387
          %v2389 = vmul.f32 %v2377, 1.442695
          %v2390 = vpow.pop %v2389
          %v2391 = vmul.f32 %v2378, 1.442695
          %v2392 = vpow.pop %v2391
          %v2393 = vmul.f32 %v2379, 1.442695
          %v2394 = vpow.pop %v2393
          %v2395 = vmul.f32 %v2380, 1.442695
          %v2396 = vpow.pop %v2395
          %v2397 = vsub.f32 %v2268, %v2365
          %v2398 = vsub.f32 %v2270, %v2366
          %v2399 = vsub.f32 %v2272, %v2367
          %v2400 = vsub.f32 %v2274, %v2368
          %v2401 = vsub.f32 %v2276, %v2369
          %v2402 = vsub.f32 %v2278, %v2370
          %v2403 = vsub.f32 %v2280, %v2371
          %v2404 = vsub.f32 %v2282, %v2372
          %v2405 = vmul.f32 %v2397, 1.442695
          %v2406 = vpow.pop %v2405
          %v2407 = vmul.f32 %v2398, 1.442695
          %v2408 = vpow.pop %v2407
          %v2409 = vmul.f32 %v2399, 1.442695
          %v2410 = vpow.pop %v2409
          %v2411 = vmul.f32 %v2400, 1.442695
          %v2412 = vpow.pop %v2411
          %v2413 = vmul.f32 %v2401, 1.442695
          %v2414 = vpow.pop %v2413
          %v2415 = vmul.f32 %v2402, 1.442695
          %v2416 = vpow.pop %v2415
          %v2417 = vmul.f32 %v2403, 1.442695
          %v2418 = vpow.pop %v2417
          %v2419 = vmul.f32 %v2404, 1.442695
          %v2420 = vpow.pop %v2419
          %v2421 = vsub.f32 %v2342, %v2365
          %v2422 = vsub.f32 %v2344, %v2366
          %v2423 = vsub.f32 %v2346, %v2367
          %v2424 = vsub.f32 %v2348, %v2368
          %v2425 = vsub.f32 %v2350, %v2369
          %v2426 = vsub.f32 %v2352, %v2370
          %v2427 = vsub.f32 %v2354, %v2371
          %v2428 = vsub.f32 %v2356, %v2372
          %v2429 = vmul.f32 %v2421, 1.442695
          %v2430 = vpow.pop %v2429
          %v2431 = vmul.f32 %v2422, 1.442695
          %v2432 = vpow.pop %v2431
          %v2433 = vmul.f32 %v2423, 1.442695
          %v2434 = vpow.pop %v2433
          %v2435 = vmul.f32 %v2424, 1.442695
          %v2436 = vpow.pop %v2435
          %v2437 = vmul.f32 %v2425, 1.442695
          %v2438 = vpow.pop %v2437
          %v2439 = vmul.f32 %v2426, 1.442695
          %v2440 = vpow.pop %v2439
          %v2441 = vmul.f32 %v2427, 1.442695
          %v2442 = vpow.pop %v2441
          %v2443 = vmul.f32 %v2428, 1.442695
          %v2444 = vpow.pop %v2443
          %v2445 = vadd.f32 %v2382, %v2406
          %v2446 = vadd.f32 %v2384, %v2408
          %v2447 = vadd.f32 %v2386, %v2410
          %v2448 = vadd.f32 %v2388, %v2412
          %v2449 = vadd.f32 %v2390, %v2414
          %v2450 = vadd.f32 %v2392, %v2416
          %v2451 = vadd.f32 %v2394, %v2418
          %v2452 = vadd.f32 %v2396, %v2420
          %v2453 = vadd.f32 %v2445, %v2430
          %v2454 = vadd.f32 %v2446, %v2432
          %v2455 = vadd.f32 %v2447, %v2434
          %v2456 = vadd.f32 %v2448, %v2436
          %v2457 = vadd.f32 %v2449, %v2438
          %v2458 = vadd.f32 %v2450, %v2440
          %v2459 = vadd.f32 %v2451, %v2442
          %v2460 = vadd.f32 %v2452, %v2444
          %v2461 = vrcp.pop %v2453
          %v2462 = vmul.f32 %v2453, %v2461
          %v2463 = vsub.f32 1.0, %v2462
          %v2464 = vmul.f32 %v2461, %v2463
          %v2465 = vadd.f32 %v2461, %v2464
          %vm2466 = vweird.f32 %v2453
          %vm2467 = vweird.f32 %v2461
          %vm2468 = vmor %vm2466, %vm2467
          %v2469 = vsel %vm2468, %v2461, %v2465
          %v2470 = vand.u32 2147483647, %v2453
          %vm2471 = vcmp.eq.f32.partialorder %v2470, 8.507059e+37
          %v2472 = vand.u32 %v2453, 2147483648
          %v2473 = vor.u32 1.1754944e-38, %v2472
          %v2474 = vsel %vm2471, %v2473, %v2469
          %v2475 = vmul.f32 1.0, %v2474
          %v2476 = vrcp.pop %v2454
          %v2477 = vmul.f32 %v2454, %v2476
          %v2478 = vsub.f32 1.0, %v2477
          %v2479 = vmul.f32 %v2476, %v2478
          %v2480 = vadd.f32 %v2476, %v2479
          %vm2481 = vweird.f32 %v2454
          %vm2482 = vweird.f32 %v2476
          %vm2483 = vmor %vm2481, %vm2482
          %v2484 = vsel %vm2483, %v2476, %v2480
          %v2485 = vand.u32 2147483647, %v2454
          %vm2486 = vcmp.eq.f32.partialorder %v2485, 8.507059e+37
          %v2487 = vand.u32 %v2454, 2147483648
          %v2488 = vor.u32 1.1754944e-38, %v2487
          %v2489 = vsel %vm2486, %v2488, %v2484
          %v2490 = vmul.f32 1.0, %v2489
          %v2491 = vrcp.pop %v2455
          %v2492 = vmul.f32 %v2455, %v2491
          %v2493 = vsub.f32 1.0, %v2492
          %v2494 = vmul.f32 %v2491, %v2493
          %v2495 = vadd.f32 %v2491, %v2494
          %vm2496 = vweird.f32 %v2455
          %vm2497 = vweird.f32 %v2491
          %vm2498 = vmor %vm2496, %vm2497
          %v2499 = vsel %vm2498, %v2491, %v2495
          %v2500 = vand.u32 2147483647, %v2455
          %vm2501 = vcmp.eq.f32.partialorder %v2500, 8.507059e+37
          %v2502 = vand.u32 %v2455, 2147483648
          %v2503 = vor.u32 1.1754944e-38, %v2502
          %v2504 = vsel %vm2501, %v2503, %v2499
          %v2505 = vmul.f32 1.0, %v2504
          %v2506 = vrcp.pop %v2456
          %v2507 = vmul.f32 %v2456, %v2506
          %v2508 = vsub.f32 1.0, %v2507
          %v2509 = vmul.f32 %v2506, %v2508
          %v2510 = vadd.f32 %v2506, %v2509
          %vm2511 = vweird.f32 %v2456
          %vm2512 = vweird.f32 %v2506
          %vm2513 = vmor %vm2511, %vm2512
          %v2514 = vsel %vm2513, %v2506, %v2510
          %v2515 = vand.u32 2147483647, %v2456
          %vm2516 = vcmp.eq.f32.partialorder %v2515, 8.507059e+37
          %v2517 = vand.u32 %v2456, 2147483648
          %v2518 = vor.u32 1.1754944e-38, %v2517
          %v2519 = vsel %vm2516, %v2518, %v2514
          %v2520 = vmul.f32 1.0, %v2519
          %v2521 = vrcp.pop %v2457
          %v2522 = vmul.f32 %v2457, %v2521
          %v2523 = vsub.f32 1.0, %v2522
          %v2524 = vmul.f32 %v2521, %v2523
          %v2525 = vadd.f32 %v2521, %v2524
          %vm2526 = vweird.f32 %v2457
          %vm2527 = vweird.f32 %v2521
          %vm2528 = vmor %vm2526, %vm2527
          %v2529 = vsel %vm2528, %v2521, %v2525
          %v2530 = vand.u32 2147483647, %v2457
          %vm2531 = vcmp.eq.f32.partialorder %v2530, 8.507059e+37
          %v2532 = vand.u32 %v2457, 2147483648
          %v2533 = vor.u32 1.1754944e-38, %v2532
          %v2534 = vsel %vm2531, %v2533, %v2529
          %v2535 = vmul.f32 1.0, %v2534
          %v2536 = vrcp.pop %v2458
          %v2537 = vmul.f32 %v2458, %v2536
          %v2538 = vsub.f32 1.0, %v2537
          %v2539 = vmul.f32 %v2536, %v2538
          %v2540 = vadd.f32 %v2536, %v2539
          %vm2541 = vweird.f32 %v2458
          %vm2542 = vweird.f32 %v2536
          %vm2543 = vmor %vm2541, %vm2542
          %v2544 = vsel %vm2543, %v2536, %v2540
          %v2545 = vand.u32 2147483647, %v2458
          %vm2546 = vcmp.eq.f32.partialorder %v2545, 8.507059e+37
          %v2547 = vand.u32 %v2458, 2147483648
          %v2548 = vor.u32 1.1754944e-38, %v2547
          %v2549 = vsel %vm2546, %v2548, %v2544
          %v2550 = vmul.f32 1.0, %v2549
          %v2551 = vrcp.pop %v2459
          %v2552 = vmul.f32 %v2459, %v2551
          %v2553 = vsub.f32 1.0, %v2552
          %v2554 = vmul.f32 %v2551, %v2553
          %v2555 = vadd.f32 %v2551, %v2554
          %vm2556 = vweird.f32 %v2459
          %vm2557 = vweird.f32 %v2551
          %vm2558 = vmor %vm2556, %vm2557
          %v2559 = vsel %vm2558, %v2551, %v2555
          %v2560 = vand.u32 2147483647, %v2459
          %vm2561 = vcmp.eq.f32.partialorder %v2560, 8.507059e+37
          %v2562 = vand.u32 %v2459, 2147483648
          %v2563 = vor.u32 1.1754944e-38, %v2562
          %v2564 = vsel %vm2561, %v2563, %v2559
          %v2565 = vmul.f32 1.0, %v2564
          %v2566 = vrcp.pop %v2460
          %v2567 = vmul.f32 %v2460, %v2566
          %v2568 = vsub.f32 1.0, %v2567
          %v2569 = vmul.f32 %v2566, %v2568
          %v2570 = vadd.f32 %v2566, %v2569
          %vm2571 = vweird.f32 %v2460
          %vm2572 = vweird.f32 %v2566
          %vm2573 = vmor %vm2571, %vm2572
          %v2574 = vsel %vm2573, %v2566, %v2570
          %v2575 = vand.u32 2147483647, %v2460
          %vm2576 = vcmp.eq.f32.partialorder %v2575, 8.507059e+37
          %v2577 = vand.u32 %v2460, 2147483648
          %v2578 = vor.u32 1.1754944e-38, %v2577
          %v2579 = vsel %vm2576, %v2578, %v2574
          %v2580 = vmul.f32 1.0, %v2579
          %v2581 = vmul.f32 %v2382, %v2475
          %v2582 = vmul.f32 %v2384, %v2490
          %v2583 = vmul.f32 %v2386, %v2505
          %v2584 = vmul.f32 %v2388, %v2520
          %v2585 = vmul.f32 %v2390, %v2535
          %v2586 = vmul.f32 %v2392, %v2550
          %v2587 = vmul.f32 %v2394, %v2565
          %v2588 = vmul.f32 %v2396, %v2580
          %v2589 = vmul.f32 %v2581, %v2082
          %v2590 = vmul.f32 %v2582, %v2083
          %v2591 = vmul.f32 %v2583, %v2084
          %v2592 = vmul.f32 %v2584, %v2085
          %v2593 = vmul.f32 %v2585, %v2086
          %v2594 = vmul.f32 %v2586, %v2087
          %v2595 = vmul.f32 %v2587, %v2088
          %v2596 = vmul.f32 %v2588, %v2089
          %v2597 = vmul.f32 %v2406, %v2475
          %v2598 = vmul.f32 %v2408, %v2490
          %v2599 = vmul.f32 %v2410, %v2505
          %v2600 = vmul.f32 %v2412, %v2520
          %v2601 = vmul.f32 %v2414, %v2535
          %v2602 = vmul.f32 %v2416, %v2550
          %v2603 = vmul.f32 %v2418, %v2565
          %v2604 = vmul.f32 %v2420, %v2580
          %v2605 = vmul.f32 %v2597, %v2210
          %v2606 = vmul.f32 %v2598, %v2211
          %v2607 = vmul.f32 %v2599, %v2212
          %v2608 = vmul.f32 %v2600, %v2213
          %v2609 = vmul.f32 %v2601, %v2214
          %v2610 = vmul.f32 %v2602, %v2215
          %v2611 = vmul.f32 %v2603, %v2216
          %v2612 = vmul.f32 %v2604, %v2217
          %v2613 = vadd.f32 %v2589, %v2605
          %v2614 = vadd.f32 %v2590, %v2606
          %v2615 = vadd.f32 %v2591, %v2607
          %v2616 = vadd.f32 %v2592, %v2608
          %v2617 = vadd.f32 %v2593, %v2609
          %v2618 = vadd.f32 %v2594, %v2610
          %v2619 = vadd.f32 %v2595, %v2611
          %v2620 = vadd.f32 %v2596, %v2612
          %v2621 = vmul.f32 %v2430, %v2475
          %v2622 = vmul.f32 %v2432, %v2490
          %v2623 = vmul.f32 %v2434, %v2505
          %v2624 = vmul.f32 %v2436, %v2520
          %v2625 = vmul.f32 %v2438, %v2535
          %v2626 = vmul.f32 %v2440, %v2550
          %v2627 = vmul.f32 %v2442, %v2565
          %v2628 = vmul.f32 %v2444, %v2580
          %v2629 = vmul.f32 %v2621, %v2284
          %v2630 = vmul.f32 %v2622, %v2285
          %v2631 = vmul.f32 %v2623, %v2286
          %v2632 = vmul.f32 %v2624, %v2287
          %v2633 = vmul.f32 %v2625, %v2288
          %v2634 = vmul.f32 %v2626, %v2289
          %v2635 = vmul.f32 %v2627, %v2290
          %v2636 = vmul.f32 %v2628, %v2291
          %v2637 = vadd.f32 %v2613, %v2629
          %v2638 = vadd.f32 %v2614, %v2630
          %v2639 = vadd.f32 %v2615, %v2631
          %v2640 = vadd.f32 %v2616, %v2632
          %v2641 = vadd.f32 %v2617, %v2633
          %v2642 = vadd.f32 %v2618, %v2634
          %v2643 = vadd.f32 %v2619, %v2635
          %v2644 = vadd.f32 %v2620, %v2636
          %2645 = vst [vmem:[%s598] sm:$0xff] %v2637
          %2646 = vst [vmem:[%s598 + $0x8] sm:$0xff] %v2638
          %2647 = vst [vmem:[%s598 + $0x10] sm:$0xff] %v2639
          %2648 = vst [vmem:[%s598 + $0x18] sm:$0xff] %v2640
          %2649 = vst [vmem:[%s598 + $0x20] sm:$0xff] %v2641
          %2650 = vst [vmem:[%s598 + $0x28] sm:$0xff] %v2642
          %2651 = vst [vmem:[%s598 + $0x30] sm:$0xff] %v2643
          %2652 = vst [vmem:[%s598 + $0x38] sm:$0xff] %v2644
        $region102: #{tpu_custom_call.1} parent=93 // pred_fallthru
          _
        %s2653 = sand.u32 %s283, 1
        %s2654 = scalar_lea.sflag [#allocation5], %s2653
        %s2655 = sand.u32 %s283, 1
        %s2656 = smul.addr %s2655, 64
        %s2657 = scalar_lea.vmem [#allocation4], %s2656
        // Predicated region
        $region103: #{tpu_custom_call.1} parent=93 // pred_check
          %p2658 = pneg %p293
        $region104: #{tpu_custom_call.1} parent=93 // pred_check_branch
          %2660 = sbr.rel (%p2658) target = $region106
        $region105: #{tpu_custom_call.1} parent=93 // pred_region
          %s2661 = smul.u32 8, %s28
          %2663 = vsyncadd %s2654, 0
          %s2664 = smul.addr %s2661, 8
          %s2665 = scalar_lea.hbm %s10, %s2664
          %s2666 = sshll.u32 %s2657, 4
          %s2667 = int_to_ptr.vmem [resolvable:$true] %s2666
          %s2668 = sshll.u32 %s2665, 4
          %s2669 = int_to_ptr.hbm [resolvable:$true] %s2668
          %2674 = dma.vmem_to_hbm [thread:$0]  %s2667, 1024, %s2669, %s2654, 128, 128, 8
        $region106: #{tpu_custom_call.1} parent=93 // pred_fallthru
          _
      $region94: #{tpu_custom_call.1} parent=5 // pred_fallthru
        _
      %p2675 = scmp.le.s32.totalorder 2, %s19
      // Predicated region
      $region107: #{tpu_custom_call.1} parent=5 // pred_check
        %p2676 = pneg %p2675
      $region108: #{tpu_custom_call.1} parent=5 // pred_check_branch
        %2678 = sbr.rel (%p2676) target = $region110
      $region109: #{tpu_custom_call.1} parent=5 // pred_region
        %s2679 = ssub.s32 %s19, 2
        // Predicated region
        $region111: #{tpu_custom_call.1} parent=109 // pred_check
          %p2680 = pneg %p299
        $region112: #{tpu_custom_call.1} parent=109 // pred_check_branch
          %2682 = sbr.rel (%p2680) target = $region114
        $region113: #{tpu_custom_call.1} parent=109 // pred_region
          %s2683 = sand.u32 %s284, 1
          %s2684 = scalar_lea.sflag [#allocation5], %s2683
          %s2685 = sand.u32 %s284, 1
          %s2686 = smul.addr %s2685, 64
          %s2687 = scalar_lea.vmem [#allocation4], %s2686
          %2689 = dma.done %s2684, 1024
        $region114: #{tpu_custom_call.1} parent=109 // pred_fallthru
          _
      $region110: #{tpu_custom_call.1} parent=5 // pred_fallthru
        _
    $region6: #{tpu_custom_call.1} parent=1 // loop_footer
      %s23 = sadd.s32 1, %s19
    $region7: #{tpu_custom_call.1} parent=1 // loop_footer_branch
      %18 = sbr.rel target = $region3
    $region8: #{tpu_custom_call.1} parent=1 // loop_exit
      _
    %2690 = vsyncpa [#allocation5], 1
    %s2691 = scalar_lea.sflag [#allocation5], 1
    %2692 = vsyncpa %s2691, 1

</llo_original>
